<compile_context>
chip_gen: v5e
topology: v5e:2x2
jax: 0.10.0
libtpu: 0.0.40
codegen_flags: <defaults>
</compile_context>

<pallas_src>
import functools

import numpy as np
import jax
import jax.numpy as jnp
from jax.experimental import pallas as pl
from jax.experimental.pallas import tpu as pltpu

# ----------------------------- irreps configuration -------------------------
# (mul, l, parity)
IRREPS_OUT = [(8, 0, +1), (4, 0, -1), (4, 1, -1), (2, 2, +1)]

SCALARS = [(m, l, p) for (m, l, p) in IRREPS_OUT if l == 0]
GATED   = [(m, l, p) for (m, l, p) in IRREPS_OUT if l > 0]

NS     = sum(m for m, _, _ in SCALARS)              # scalar dims (12)
NG     = sum(m for m, _, _ in GATED)                # gate dims, one 0e per gated mul (6)
NGATED = sum(m * (2 * l + 1) for m, l, _ in GATED)  # gated dims (22)
D_IN   = NS + NG + NGATED                           # 40
D_OUT  = NS + NGATED                                # 34

# Static lane segments (python ints; used only at trace time to build masks).
_SCALAR_SEGMENTS = []          # (start, end, parity) within the scalar block
_off = 0
for (_m, _l, _p) in SCALARS:
    _SCALAR_SEGMENTS.append((_off, _off + _m, _p))
    _off += _m

_GATE_SEGMENTS = []            # (start, end, gate_index) within the gated block
_col, _g = 0, 0
for (_m, _l, _p) in GATED:
    _d = 2 * _l + 1
    for _k in range(_m):
        _GATE_SEGMENTS.append((_col, _col + _d, _g))
        _col += _d
        _g += 1

# gate index per gated lane (host-side, used only by the pure-JAX reference)
GATE_IDX = np.concatenate(
    [np.full(e - s, k, dtype=np.int32) for (s, e, k) in _GATE_SEGMENTS])


# ------------------- e3nn normalize2mom constants (deterministic) -----------
def _second_moment(f, n=201):
    x, w = np.polynomial.hermite_e.hermegauss(n)
    return float((w * f(x) ** 2).sum() / np.sqrt(2.0 * np.pi))


C_LRELU = _second_moment(lambda z: np.where(z >= 0, z, 0.01 * z)) ** -0.5
C_TANH  = _second_moment(np.tanh) ** -0.5
C_SIG   = _second_moment(lambda z: 1.0 / (1.0 + np.exp(-z))) ** -0.5

# Rows per in-register sub-chunk inside a block (multiple of 32 => valid sublane
# packing for f32 / bf16 / 8-bit dtypes).
CHUNK = 256


# --------------------------------- kernel -----------------------------------
def _gate_kernel(x_ref, o_ref, *, tile, chunk):
    n_chunks = tile // chunk

    # Loop-invariant lane masks, built once per kernel invocation (hoisted out of
    # the chunk loop on purpose: broadcast/iota are not CSE'd across iterations).
    lane_in  = jax.lax.broadcasted_iota(jnp.int32, (chunk, D_IN), 1)
    lane_out = jax.lax.broadcasted_iota(jnp.int32, (chunk, D_OUT), 1)
    scalar_masks = [(lane_in < end, p) for (_s, end, p) in _SCALAR_SEGMENTS]
    gate_masks   = [(lane_in < (NS + NG + end), k) for (_s, end, k) in _GATE_SEGMENTS]
    out_mask = lane_out < NS                      # True -> scalar lanes of output

    def body(i, carry):
        r0 = pl.multiple_of(i * chunk, chunk)
        xc = x_ref[pl.ds(r0, chunk), :].astype(jnp.float32)   # (chunk, D_IN)

        # ---- scalar irreps: parity-dependent activation with fused scale ------
        # Ops are per-vreg, so computing on the full 40-lane width costs the same
        # as computing on 12 lanes; only lanes < NS of `act` are ever used.
        lrelu = jnp.where(xc >= 0, xc, 0.01 * xc) * C_LRELU    # LeakyReLU(0.01)
        tanhv = jnp.tanh(xc) * C_TANH                          # Tanh (EUP)
        act = None
        for (m, p) in reversed(scalar_masks):
            branch = lrelu if p == +1 else tanhv
            act = branch if act is None else jnp.where(m, branch, act)

        # ---- gates: sigmoid (gates are always 0e by construction) -------------
        gact = jax.nn.sigmoid(xc) * C_SIG                      # lanes NS..NS+NG-1 used

        # ---- expand gates to gated lanes: static lane broadcasts + selects ----
        gmul = None
        for (m, k) in reversed(gate_masks):
            col = jnp.broadcast_to(gact[:, NS + k:NS + k + 1], (chunk, D_IN))
            gmul = col if gmul is None else jnp.where(m, col, gmul)
        gated_out = xc * gmul                                  # lanes NS+NG.. used

        # ---- assemble full 34-lane output and store ONCE per chunk ------------
        # gated_out[:, NG:NG+D_OUT] puts lanes [NS+NG, D_IN) at output lanes
        # [NS, D_OUT) (a single lane shift of 6); one select merges the scalars.
        out = jnp.where(out_mask, act[:, :D_OUT], gated_out[:, NG:NG + D_OUT])
        o_ref[pl.ds(r0, chunk), :] = out.astype(o_ref.dtype)
        return carry

    jax.lax.fori_loop(0, n_chunks, body, 0)


# --------------------------------- wrapper ----------------------------------
def _round_up(n, m):
    return ((n + m - 1) // m) * m


def gate_forward(x, *, tile_n=8192):
    """Apply the equivariant gate to x of shape [N, D_IN] (f32/bf16/fp16)."""
    N, d = x.shape
    assert d == D_IN
    # Big row tile amortizes the per-grid-step pipeline overhead; the grid uses
    # pl.cdiv so N need not divide the tile (padded tail rows are dropped on
    # writeback).  The tile is a multiple of CHUNK so the in-kernel sub-chunk
    # loop covers it exactly.
    tile = min(_round_up(tile_n, CHUNK), _round_up(N, CHUNK))
    grid = (pl.cdiv(N, tile),)

    itemsize = np.dtype(x.dtype).itemsize
    cost = pl.CostEstimate(
        flops=int(N) * D_IN * 8,
        transcendentals=int(N) * 2 * D_IN,
        bytes_accessed=int(N) * (D_IN + D_OUT) * itemsize,
    )

    kernel = functools.partial(_gate_kernel, tile=tile, chunk=CHUNK)
    return pl.pallas_call(
        kernel,
        out_shape=jax.ShapeDtypeStruct((N, D_OUT), x.dtype),
        grid_spec=pltpu.PrefetchScalarGridSpec(
            num_scalar_prefetch=0,
            grid=grid,
            in_specs=[pl.BlockSpec((tile, D_IN), lambda i: (i, 0))],
            out_specs=pl.BlockSpec((tile, D_OUT), lambda i: (i, 0)),
        ),
        compiler_params=pltpu.CompilerParams(
            # TODO(synk): use (pltpu.CORE_PARALLEL,) + 16K-row tiles on v7x to
            # split row tiles across both TensorCores.
            dimension_semantics=("parallel",),
        ),
        cost_estimate=cost,
    )(x)


# ------------------------------- reference ----------------------------------
def gate_reference(x):
    x = x.astype(jnp.float32)
    outs = []
    off = 0
    for (m, l, p) in SCALARS:
        s = x[:, off:off + m]
        a = jnp.where(s >= 0, s, 0.01 * s) * C_LRELU if p == +1 else jnp.tanh(s) * C_TANH
        outs.append(a)
        off += m
    g = jax.nn.sigmoid(x[:, NS:NS + NG]) * C_SIG
    outs.append(x[:, NS + NG:] * g[:, GATE_IDX])
    return jnp.concatenate(outs, axis=-1)


if __name__ == "__main__":
    key = jax.random.PRNGKey(0)
    N = 1000   # deliberately not a multiple of CHUNK/tile -> exercises padded tail
    x = jax.random.normal(key, (N, D_IN), dtype=jnp.float32)

    # f32 path (single block, multiple in-kernel sub-chunks)
    out = jax.block_until_ready(gate_forward(x))
    ref = gate_reference(x)
    np.testing.assert_allclose(np.asarray(out), np.asarray(ref), rtol=1e-5, atol=1e-5)
    assert out.shape == (N, D_OUT)

    # multi-block path: grid > 1 with a partially out-of-bounds tail block
    out_mb = jax.block_until_ready(gate_forward(x, tile_n=512))
    np.testing.assert_allclose(np.asarray(out_mb), np.asarray(ref), rtol=1e-5, atol=1e-5)

    # bf16 I/O path (halves HBM bytes; internal compute stays f32)
    xb = x.astype(jnp.bfloat16)
    outb = jax.block_until_ready(gate_forward(xb))
    assert outb.dtype == jnp.bfloat16
    refb = gate_reference(xb)
    np.testing.assert_allclose(np.asarray(outb).astype(np.float32),
                               np.asarray(refb), rtol=2e-2, atol=2e-2)

    print("KERNEL_OK")
</pallas_src>

<mosaic_0001>
module attributes {stable_mosaic.version = 11 : i64} {
  func.func @_gate_kernel(%arg0: i32, %arg1: memref<1024x40xf32, #tpu.memory_space<vmem>>, %arg2: memref<1024x34xf32, #tpu.memory_space<vmem>>) attributes {dimension_semantics = [#tpu.dimension_semantics<parallel>], iteration_bounds = array<i64: 1>, scalar_prefetch = 0 : i64, scratch_operands = 0 : i64, tpu.core_type = #tpu.core_type<tc>, window_params = [{transform_indices = @transform_0, window_bounds = array<i64: 1024, 40>}, {transform_indices = @transform_1, window_bounds = array<i64: 1024, 34>}]} {
    %0 = tpu.iota {dimensions = array<i32: 1>} : vector<256x40xi32>
    %1 = tpu.iota {dimensions = array<i32: 1>} : vector<256x34xi32>
    %c8_i32 = arith.constant 8 : i32
    %2 = vector.broadcast %c8_i32 : i32 to vector<256x40xi32>
    %3 = arith.cmpi slt, %0, %2 : vector<256x40xi32>
    %c21_i32 = arith.constant 21 : i32
    %4 = vector.broadcast %c21_i32 : i32 to vector<256x40xi32>
    %5 = arith.cmpi slt, %0, %4 : vector<256x40xi32>
    %c24_i32 = arith.constant 24 : i32
    %6 = vector.broadcast %c24_i32 : i32 to vector<256x40xi32>
    %7 = arith.cmpi slt, %0, %6 : vector<256x40xi32>
    %c27_i32 = arith.constant 27 : i32
    %8 = vector.broadcast %c27_i32 : i32 to vector<256x40xi32>
    %9 = arith.cmpi slt, %0, %8 : vector<256x40xi32>
    %c30_i32 = arith.constant 30 : i32
    %10 = vector.broadcast %c30_i32 : i32 to vector<256x40xi32>
    %11 = arith.cmpi slt, %0, %10 : vector<256x40xi32>
    %c35_i32 = arith.constant 35 : i32
    %12 = vector.broadcast %c35_i32 : i32 to vector<256x40xi32>
    %13 = arith.cmpi slt, %0, %12 : vector<256x40xi32>
    %c12_i32 = arith.constant 12 : i32
    %14 = vector.broadcast %c12_i32 : i32 to vector<256x34xi32>
    %15 = arith.cmpi slt, %1, %14 : vector<256x34xi32>
    %c0_i32 = arith.constant 0 : i32
    %c4_i32 = arith.constant 4 : i32
    %16 = arith.addi %c0_i32, %c4_i32 : i32
    %c1_i32 = arith.constant 1 : i32
    scf.for %arg3 = %c0_i32 to %16 step %c1_i32  : i32 {
      %c256_i32 = arith.constant 256 : i32
      %17 = arith.muli %arg3, %c256_i32 : i32
      %18 = tpu.assume_multiple %17, 256 : i32
      %19 = arith.index_cast %18 : i32 to index
      %c0 = arith.constant 0 : index
      %20 = vector.load %arg1[%19, %c0] : memref<1024x40xf32, #tpu.memory_space<vmem>>, vector<256x40xf32>
      %cst = arith.constant 0.000000e+00 : f32
      %21 = vector.broadcast %cst : f32 to vector<256x40xf32>
      %22 = arith.cmpf oge, %20, %21 : vector<256x40xf32>
      %cst_1 = arith.constant 0.00999999977 : f32
      %23 = vector.broadcast %cst_1 : f32 to vector<256x40xf32>
      %24 = arith.mulf %23, %20 : vector<256x40xf32>
      %25 = arith.select %22, %20, %24 : vector<256x40xi1>, vector<256x40xf32>
      %cst_2 = arith.constant 1.41414285 : f32
      %26 = vector.broadcast %cst_2 : f32 to vector<256x40xf32>
      %27 = arith.mulf %25, %26 : vector<256x40xf32>
      %28 = math.tanh %20 : vector<256x40xf32>
      %cst_3 = arith.constant 1.5925374 : f32
      %29 = vector.broadcast %cst_3 : f32 to vector<256x40xf32>
      %30 = arith.mulf %28, %29 : vector<256x40xf32>
      %31 = arith.select %3, %27, %30 : vector<256x40xi1>, vector<256x40xf32>
      %32 = arith.negf %20 : vector<256x40xf32>
      %33 = math.exp %32 : vector<256x40xf32>
      %cst_4 = arith.constant 1.000000e+00 : f32
      %34 = vector.broadcast %cst_4 : f32 to vector<256x40xf32>
      %35 = arith.addf %34, %33 : vector<256x40xf32>
      %36 = arith.divf %34, %35 : vector<256x40xf32>
      %cst_5 = arith.constant 1.8462286 : f32
      %37 = vector.broadcast %cst_5 : f32 to vector<256x40xf32>
      %38 = arith.mulf %36, %37 : vector<256x40xf32>
      %39 = vector.extract_strided_slice %38 {offsets = [0, 17], sizes = [256, 1], strides = [1, 1]} : vector<256x40xf32> to vector<256x1xf32>
      %40 = vector.shape_cast %39 : vector<256x1xf32> to vector<256x1xf32>
      %41 = vector.broadcast %40 : vector<256x1xf32> to vector<256x40xf32>
      %42 = vector.extract_strided_slice %38 {offsets = [0, 16], sizes = [256, 1], strides = [1, 1]} : vector<256x40xf32> to vector<256x1xf32>
      %43 = vector.shape_cast %42 : vector<256x1xf32> to vector<256x1xf32>
      %44 = vector.broadcast %43 : vector<256x1xf32> to vector<256x40xf32>
      %45 = arith.select %13, %44, %41 : vector<256x40xi1>, vector<256x40xf32>
      %46 = vector.extract_strided_slice %38 {offsets = [0, 15], sizes = [256, 1], strides = [1, 1]} : vector<256x40xf32> to vector<256x1xf32>
      %47 = vector.shape_cast %46 : vector<256x1xf32> to vector<256x1xf32>
      %48 = vector.broadcast %47 : vector<256x1xf32> to vector<256x40xf32>
      %49 = arith.select %11, %48, %45 : vector<256x40xi1>, vector<256x40xf32>
      %50 = vector.extract_strided_slice %38 {offsets = [0, 14], sizes = [256, 1], strides = [1, 1]} : vector<256x40xf32> to vector<256x1xf32>
      %51 = vector.shape_cast %50 : vector<256x1xf32> to vector<256x1xf32>
      %52 = vector.broadcast %51 : vector<256x1xf32> to vector<256x40xf32>
      %53 = arith.select %9, %52, %49 : vector<256x40xi1>, vector<256x40xf32>
      %54 = vector.extract_strided_slice %38 {offsets = [0, 13], sizes = [256, 1], strides = [1, 1]} : vector<256x40xf32> to vector<256x1xf32>
      %55 = vector.shape_cast %54 : vector<256x1xf32> to vector<256x1xf32>
      %56 = vector.broadcast %55 : vector<256x1xf32> to vector<256x40xf32>
      %57 = arith.select %7, %56, %53 : vector<256x40xi1>, vector<256x40xf32>
      %58 = vector.extract_strided_slice %38 {offsets = [0, 12], sizes = [256, 1], strides = [1, 1]} : vector<256x40xf32> to vector<256x1xf32>
      %59 = vector.shape_cast %58 : vector<256x1xf32> to vector<256x1xf32>
      %60 = vector.broadcast %59 : vector<256x1xf32> to vector<256x40xf32>
      %61 = arith.select %5, %60, %57 : vector<256x40xi1>, vector<256x40xf32>
      %62 = arith.mulf %20, %61 : vector<256x40xf32>
      %63 = vector.extract_strided_slice %31 {offsets = [0, 0], sizes = [256, 34], strides = [1, 1]} : vector<256x40xf32> to vector<256x34xf32>
      %64 = vector.extract_strided_slice %62 {offsets = [0, 6], sizes = [256, 34], strides = [1, 1]} : vector<256x40xf32> to vector<256x34xf32>
      %65 = arith.select %15, %63, %64 : vector<256x34xi1>, vector<256x34xf32>
      %66 = arith.index_cast %18 : i32 to index
      %c0_6 = arith.constant 0 : index
      %67 = vector.load %arg2[%66, %c0_6] : memref<1024x34xf32, #tpu.memory_space<vmem>>, vector<256x34xf32>
      tpu.vector_store %arg2[%66, %c0_6], %65 {strides = array<i32>} : memref<1024x34xf32, #tpu.memory_space<vmem>>, vector<256x34xf32>,
    }
    %c4_i32_0 = arith.constant 4 : i32
    return
  }
  func.func @transform_0(%arg0: i32) -> (i32, i32) {
    %c0_i32 = arith.constant 0 : i32
    %c0_i32_0 = arith.constant 0 : i32
    return %arg0, %c0_i32 : i32, i32
  }
  func.func @transform_1(%arg0: i32) -> (i32, i32) {
    %c0_i32 = arith.constant 0 : i32
    %c0_i32_0 = arith.constant 0 : i32
    return %arg0, %c0_i32 : i32, i32
  }
}

</mosaic_0001>

<llo_original>
// kernel: tpu_custom_call.1
$region0: #{tpu_custom_call.1}
  #allocation0 [shape = 'u32[]', space=smem, size = 0x4, offset = 0x4, fixed_abs, tag = 'smem constant byte address 0x4 - core index']
  #allocation1 [shape = 'u32[72,128]{1,0:T(1,128)}', space=vmem, size = 0x9000, scoped, tag = 'internal scratch']
  %s0 = inlined_call_operand.vmem [shape: f32[1000,40], index: 0, kind: input, shape index: {}]
  %s1 = inlined_call_operand.vmem [shape: f32[1000,34], index: 1, kind: output, shape index: {}]
  %s2 = sld [smem:[#allocation0]]
  $region55: #{tpu_custom_call.1} parent=0
    _
  %s4 = ssub.s32 1, %s2
  %s5 = scalar_select 0, %s4, %s2
  $region1: #{tpu_custom_call.1} parent=0
    #allocation2 [shape = 'u8[524288]{0}', space=vmem, size = 0x80000, scoped, tag = 'output window, operand 0, single buffered']
    // Predicated region
    $region2: #{tpu_custom_call.1} parent=1 // pred_check
      _
    $region3: #{tpu_custom_call.1} parent=1 // pred_check_branch
      %7 = sbr.rel (0) target = $region5
    $region4: #{tpu_custom_call.1} parent=1 // pred_region
      _
    $region5: #{tpu_custom_call.1} parent=1 // pred_fallthru
      _
    %v8 = vlaneseq
    %v9 = vand.u32 %v8, 127
    %vm10 = vcmp.lt.s32.totalorder %v9, 8
    %vm11 = vcmp.lt.s32.totalorder %v9, 21
    %vm12 = vcmp.lt.s32.totalorder %v9, 24
    %vm13 = vcmp.lt.s32.totalorder %v9, 27
    %vm14 = vcmp.lt.s32.totalorder %v9, 30
    %vm15 = vcmp.lt.s32.totalorder %v9, 35
    %vm16 = vcmp.lt.s32.totalorder %v9, 12
    loop: start=0, step=1, limit=4
    $region6: #{tpu_custom_call.1} parent=1 // loop_pre_header
      _
    $region7: #{tpu_custom_call.1} parent=1 // loop_header
      %s18 = sphi 0, %s22
      %p19 = scmp.ge.s32.totalorder %s18, 4
    $region8: #{tpu_custom_call.1} parent=1 // loop_header_branch
      %21 = sbr.rel (%p19) target = $region12
    $region9: #{tpu_custom_call.1} parent=1 // loop_body
      %s23 = smul.u32 %s18, 256
      %s24 = scalar_lea.vmem %s0, %s23
      %v25 = vld [vmem:[%s24] sm:$0xff]
      %v26 = vld [vmem:[%s24 + $0x8] sm:$0xff]
      %v27 = vld [vmem:[%s24 + $0x10] sm:$0xff]
      %v28 = vld [vmem:[%s24 + $0x18] sm:$0xff]
      %v29 = vld [vmem:[%s24 + $0x20] sm:$0xff]
      %v30 = vld [vmem:[%s24 + $0x28] sm:$0xff]
      %v31 = vld [vmem:[%s24 + $0x30] sm:$0xff]
      %v32 = vld [vmem:[%s24 + $0x38] sm:$0xff]
      %v33 = vld [vmem:[%s24 + $0x40] sm:$0xff]
      %v34 = vld [vmem:[%s24 + $0x48] sm:$0xff]
      %v35 = vld [vmem:[%s24 + $0x50] sm:$0xff]
      %v36 = vld [vmem:[%s24 + $0x58] sm:$0xff]
      %v37 = vld [vmem:[%s24 + $0x60] sm:$0xff]
      %v38 = vld [vmem:[%s24 + $0x68] sm:$0xff]
      %v39 = vld [vmem:[%s24 + $0x70] sm:$0xff]
      %v40 = vld [vmem:[%s24 + $0x78] sm:$0xff]
      %v41 = vld [vmem:[%s24 + $0x80] sm:$0xff]
      %v42 = vld [vmem:[%s24 + $0x88] sm:$0xff]
      %v43 = vld [vmem:[%s24 + $0x90] sm:$0xff]
      %v44 = vld [vmem:[%s24 + $0x98] sm:$0xff]
      %v45 = vld [vmem:[%s24 + $0xa0] sm:$0xff]
      %v46 = vld [vmem:[%s24 + $0xa8] sm:$0xff]
      %v47 = vld [vmem:[%s24 + $0xb0] sm:$0xff]
      %v48 = vld [vmem:[%s24 + $0xb8] sm:$0xff]
      %v49 = vld [vmem:[%s24 + $0xc0] sm:$0xff]
      %v50 = vld [vmem:[%s24 + $0xc8] sm:$0xff]
      %v51 = vld [vmem:[%s24 + $0xd0] sm:$0xff]
      %v52 = vld [vmem:[%s24 + $0xd8] sm:$0xff]
      %v53 = vld [vmem:[%s24 + $0xe0] sm:$0xff]
      %v54 = vld [vmem:[%s24 + $0xe8] sm:$0xff]
      %v55 = vld [vmem:[%s24 + $0xf0] sm:$0xff]
      %v56 = vld [vmem:[%s24 + $0xf8] sm:$0xff]
      %vm57 = vcmp.ge.f32.partialorder %v25, 0.0
      %vm58 = vcmp.ge.f32.partialorder %v26, 0.0
      %vm59 = vcmp.ge.f32.partialorder %v27, 0.0
      %vm60 = vcmp.ge.f32.partialorder %v28, 0.0
      %vm61 = vcmp.ge.f32.partialorder %v29, 0.0
      %vm62 = vcmp.ge.f32.partialorder %v30, 0.0
      %vm63 = vcmp.ge.f32.partialorder %v31, 0.0
      %vm64 = vcmp.ge.f32.partialorder %v32, 0.0
      %vm65 = vcmp.ge.f32.partialorder %v33, 0.0
      %vm66 = vcmp.ge.f32.partialorder %v34, 0.0
      %vm67 = vcmp.ge.f32.partialorder %v35, 0.0
      %vm68 = vcmp.ge.f32.partialorder %v36, 0.0
      %vm69 = vcmp.ge.f32.partialorder %v37, 0.0
      %vm70 = vcmp.ge.f32.partialorder %v38, 0.0
      %vm71 = vcmp.ge.f32.partialorder %v39, 0.0
      %vm72 = vcmp.ge.f32.partialorder %v40, 0.0
      %vm73 = vcmp.ge.f32.partialorder %v41, 0.0
      %vm74 = vcmp.ge.f32.partialorder %v42, 0.0
      %vm75 = vcmp.ge.f32.partialorder %v43, 0.0
      %vm76 = vcmp.ge.f32.partialorder %v44, 0.0
      %vm77 = vcmp.ge.f32.partialorder %v45, 0.0
      %vm78 = vcmp.ge.f32.partialorder %v46, 0.0
      %vm79 = vcmp.ge.f32.partialorder %v47, 0.0
      %vm80 = vcmp.ge.f32.partialorder %v48, 0.0
      %vm81 = vcmp.ge.f32.partialorder %v49, 0.0
      %vm82 = vcmp.ge.f32.partialorder %v50, 0.0
      %vm83 = vcmp.ge.f32.partialorder %v51, 0.0
      %vm84 = vcmp.ge.f32.partialorder %v52, 0.0
      %vm85 = vcmp.ge.f32.partialorder %v53, 0.0
      %vm86 = vcmp.ge.f32.partialorder %v54, 0.0
      %vm87 = vcmp.ge.f32.partialorder %v55, 0.0
      %vm88 = vcmp.ge.f32.partialorder %v56, 0.0
      %v89 = vmul.f32 %v25, 0.01
      %v90 = vmul.f32 %v26, 0.01
      %v91 = vmul.f32 %v27, 0.01
      %v92 = vmul.f32 %v28, 0.01
      %v93 = vmul.f32 %v29, 0.01
      %v94 = vmul.f32 %v30, 0.01
      %v95 = vmul.f32 %v31, 0.01
      %v96 = vmul.f32 %v32, 0.01
      %v97 = vmul.f32 %v33, 0.01
      %v98 = vmul.f32 %v34, 0.01
      %v99 = vmul.f32 %v35, 0.01
      %v100 = vmul.f32 %v36, 0.01
      %v101 = vmul.f32 %v37, 0.01
      %v102 = vmul.f32 %v38, 0.01
      %v103 = vmul.f32 %v39, 0.01
      %v104 = vmul.f32 %v40, 0.01
      %v105 = vmul.f32 %v41, 0.01
      %v106 = vmul.f32 %v42, 0.01
      %v107 = vmul.f32 %v43, 0.01
      %v108 = vmul.f32 %v44, 0.01
      %v109 = vmul.f32 %v45, 0.01
      %v110 = vmul.f32 %v46, 0.01
      %v111 = vmul.f32 %v47, 0.01
      %v112 = vmul.f32 %v48, 0.01
      %v113 = vmul.f32 %v49, 0.01
      %v114 = vmul.f32 %v50, 0.01
      %v115 = vmul.f32 %v51, 0.01
      %v116 = vmul.f32 %v52, 0.01
      %v117 = vmul.f32 %v53, 0.01
      %v118 = vmul.f32 %v54, 0.01
      %v119 = vmul.f32 %v55, 0.01
      %v120 = vmul.f32 %v56, 0.01
      %v121 = vsel %vm57, %v25, %v89
      %v122 = vsel %vm58, %v26, %v90
      %v123 = vsel %vm59, %v27, %v91
      %v124 = vsel %vm60, %v28, %v92
      %v125 = vsel %vm61, %v29, %v93
      %v126 = vsel %vm62, %v30, %v94
      %v127 = vsel %vm63, %v31, %v95
      %v128 = vsel %vm64, %v32, %v96
      %v129 = vsel %vm65, %v33, %v97
      %v130 = vsel %vm66, %v34, %v98
      %v131 = vsel %vm67, %v35, %v99
      %v132 = vsel %vm68, %v36, %v100
      %v133 = vsel %vm69, %v37, %v101
      %v134 = vsel %vm70, %v38, %v102
      %v135 = vsel %vm71, %v39, %v103
      %v136 = vsel %vm72, %v40, %v104
      %v137 = vsel %vm73, %v41, %v105
      %v138 = vsel %vm74, %v42, %v106
      %v139 = vsel %vm75, %v43, %v107
      %v140 = vsel %vm76, %v44, %v108
      %v141 = vsel %vm77, %v45, %v109
      %v142 = vsel %vm78, %v46, %v110
      %v143 = vsel %vm79, %v47, %v111
      %v144 = vsel %vm80, %v48, %v112
      %v145 = vsel %vm81, %v49, %v113
      %v146 = vsel %vm82, %v50, %v114
      %v147 = vsel %vm83, %v51, %v115
      %v148 = vsel %vm84, %v52, %v116
      %v149 = vsel %vm85, %v53, %v117
      %v150 = vsel %vm86, %v54, %v118
      %v151 = vsel %vm87, %v55, %v119
      %v152 = vsel %vm88, %v56, %v120
      %v153 = vmul.f32 %v121, 1.4141428
      %v154 = vmul.f32 %v122, 1.4141428
      %v155 = vmul.f32 %v123, 1.4141428
      %v156 = vmul.f32 %v124, 1.4141428
      %v157 = vmul.f32 %v125, 1.4141428
      %v158 = vmul.f32 %v126, 1.4141428
      %v159 = vmul.f32 %v127, 1.4141428
      %v160 = vmul.f32 %v128, 1.4141428
      %v161 = vmul.f32 %v129, 1.4141428
      %v162 = vmul.f32 %v130, 1.4141428
      %v163 = vmul.f32 %v131, 1.4141428
      %v164 = vmul.f32 %v132, 1.4141428
      %v165 = vmul.f32 %v133, 1.4141428
      %v166 = vmul.f32 %v134, 1.4141428
      %v167 = vmul.f32 %v135, 1.4141428
      %v168 = vmul.f32 %v136, 1.4141428
      %v169 = vmul.f32 %v137, 1.4141428
      %v170 = vmul.f32 %v138, 1.4141428
      %v171 = vmul.f32 %v139, 1.4141428
      %v172 = vmul.f32 %v140, 1.4141428
      %v173 = vmul.f32 %v141, 1.4141428
      %v174 = vmul.f32 %v142, 1.4141428
      %v175 = vmul.f32 %v143, 1.4141428
      %v176 = vmul.f32 %v144, 1.4141428
      %v177 = vmul.f32 %v145, 1.4141428
      %v178 = vmul.f32 %v146, 1.4141428
      %v179 = vmul.f32 %v147, 1.4141428
      %v180 = vmul.f32 %v148, 1.4141428
      %v181 = vmul.f32 %v149, 1.4141428
      %v182 = vmul.f32 %v150, 1.4141428
      %v183 = vmul.f32 %v151, 1.4141428
      %v184 = vmul.f32 %v152, 1.4141428
      %v185 = vtanh.pop %v25
      %v186 = vtanh.pop %v26
      %v187 = vtanh.pop %v27
      %v188 = vtanh.pop %v28
      %v189 = vtanh.pop %v29
      %v190 = vtanh.pop %v30
      %v191 = vtanh.pop %v31
      %v192 = vtanh.pop %v32
      %v193 = vtanh.pop %v33
      %v194 = vtanh.pop %v34
      %v195 = vtanh.pop %v35
      %v196 = vtanh.pop %v36
      %v197 = vtanh.pop %v37
      %v198 = vtanh.pop %v38
      %v199 = vtanh.pop %v39
      %v200 = vtanh.pop %v40
      %v201 = vtanh.pop %v41
      %v202 = vtanh.pop %v42
      %v203 = vtanh.pop %v43
      %v204 = vtanh.pop %v44
      %v205 = vtanh.pop %v45
      %v206 = vtanh.pop %v46
      %v207 = vtanh.pop %v47
      %v208 = vtanh.pop %v48
      %v209 = vtanh.pop %v49
      %v210 = vtanh.pop %v50
      %v211 = vtanh.pop %v51
      %v212 = vtanh.pop %v52
      %v213 = vtanh.pop %v53
      %v214 = vtanh.pop %v54
      %v215 = vtanh.pop %v55
      %v216 = vtanh.pop %v56
      %v217 = vmul.f32 %v185, 1.5925374
      %v218 = vmul.f32 %v186, 1.5925374
      %v219 = vmul.f32 %v187, 1.5925374
      %v220 = vmul.f32 %v188, 1.5925374
      %v221 = vmul.f32 %v189, 1.5925374
      %v222 = vmul.f32 %v190, 1.5925374
      %v223 = vmul.f32 %v191, 1.5925374
      %v224 = vmul.f32 %v192, 1.5925374
      %v225 = vmul.f32 %v193, 1.5925374
      %v226 = vmul.f32 %v194, 1.5925374
      %v227 = vmul.f32 %v195, 1.5925374
      %v228 = vmul.f32 %v196, 1.5925374
      %v229 = vmul.f32 %v197, 1.5925374
      %v230 = vmul.f32 %v198, 1.5925374
      %v231 = vmul.f32 %v199, 1.5925374
      %v232 = vmul.f32 %v200, 1.5925374
      %v233 = vmul.f32 %v201, 1.5925374
      %v234 = vmul.f32 %v202, 1.5925374
      %v235 = vmul.f32 %v203, 1.5925374
      %v236 = vmul.f32 %v204, 1.5925374
      %v237 = vmul.f32 %v205, 1.5925374
      %v238 = vmul.f32 %v206, 1.5925374
      %v239 = vmul.f32 %v207, 1.5925374
      %v240 = vmul.f32 %v208, 1.5925374
      %v241 = vmul.f32 %v209, 1.5925374
      %v242 = vmul.f32 %v210, 1.5925374
      %v243 = vmul.f32 %v211, 1.5925374
      %v244 = vmul.f32 %v212, 1.5925374
      %v245 = vmul.f32 %v213, 1.5925374
      %v246 = vmul.f32 %v214, 1.5925374
      %v247 = vmul.f32 %v215, 1.5925374
      %v248 = vmul.f32 %v216, 1.5925374
      %v249 = vsel %vm10, %v153, %v217
      %v250 = vsel %vm10, %v154, %v218
      %v251 = vsel %vm10, %v155, %v219
      %v252 = vsel %vm10, %v156, %v220
      %v253 = vsel %vm10, %v157, %v221
      %v254 = vsel %vm10, %v158, %v222
      %v255 = vsel %vm10, %v159, %v223
      %v256 = vsel %vm10, %v160, %v224
      %v257 = vsel %vm10, %v161, %v225
      %v258 = vsel %vm10, %v162, %v226
      %v259 = vsel %vm10, %v163, %v227
      %v260 = vsel %vm10, %v164, %v228
      %v261 = vsel %vm10, %v165, %v229
      %v262 = vsel %vm10, %v166, %v230
      %v263 = vsel %vm10, %v167, %v231
      %v264 = vsel %vm10, %v168, %v232
      %v265 = vsel %vm10, %v169, %v233
      %v266 = vsel %vm10, %v170, %v234
      %v267 = vsel %vm10, %v171, %v235
      %v268 = vsel %vm10, %v172, %v236
      %v269 = vsel %vm10, %v173, %v237
      %v270 = vsel %vm10, %v174, %v238
      %v271 = vsel %vm10, %v175, %v239
      %v272 = vsel %vm10, %v176, %v240
      %v273 = vsel %vm10, %v177, %v241
      %v274 = vsel %vm10, %v178, %v242
      %v275 = vsel %vm10, %v179, %v243
      %v276 = vsel %vm10, %v180, %v244
      %v277 = vsel %vm10, %v181, %v245
      %v278 = vsel %vm10, %v182, %v246
      %v279 = vsel %vm10, %v183, %v247
      %v280 = vsel %vm10, %v184, %v248
      %v281 = vxor.u32 %v25, 2147483648
      %v282 = vxor.u32 %v26, 2147483648
      %v283 = vxor.u32 %v27, 2147483648
      %v284 = vxor.u32 %v28, 2147483648
      %v285 = vxor.u32 %v29, 2147483648
      %v286 = vxor.u32 %v30, 2147483648
      %v287 = vxor.u32 %v31, 2147483648
      %v288 = vxor.u32 %v32, 2147483648
      %v289 = vxor.u32 %v33, 2147483648
      %v290 = vxor.u32 %v34, 2147483648
      %v291 = vxor.u32 %v35, 2147483648
      %v292 = vxor.u32 %v36, 2147483648
      %v293 = vxor.u32 %v37, 2147483648
      %v294 = vxor.u32 %v38, 2147483648
      %v295 = vxor.u32 %v39, 2147483648
      %v296 = vxor.u32 %v40, 2147483648
      %v297 = vxor.u32 %v41, 2147483648
      %v298 = vxor.u32 %v42, 2147483648
      %v299 = vxor.u32 %v43, 2147483648
      %v300 = vxor.u32 %v44, 2147483648
      %v301 = vxor.u32 %v45, 2147483648
      %v302 = vxor.u32 %v46, 2147483648
      %v303 = vxor.u32 %v47, 2147483648
      %v304 = vxor.u32 %v48, 2147483648
      %v305 = vxor.u32 %v49, 2147483648
      %v306 = vxor.u32 %v50, 2147483648
      %v307 = vxor.u32 %v51, 2147483648
      %v308 = vxor.u32 %v52, 2147483648
      %v309 = vxor.u32 %v53, 2147483648
      %v310 = vxor.u32 %v54, 2147483648
      %v311 = vxor.u32 %v55, 2147483648
      %v312 = vxor.u32 %v56, 2147483648
      %v313 = vmul.f32 %v281, 1.442695
      %v314 = vpow.pop %v313
      %v315 = vmul.f32 %v282, 1.442695
      %v316 = vpow.pop %v315
      %v317 = vmul.f32 %v283, 1.442695
      %v318 = vpow.pop %v317
      %v319 = vmul.f32 %v284, 1.442695
      %v320 = vpow.pop %v319
      %v321 = vmul.f32 %v285, 1.442695
      %v322 = vpow.pop %v321
      %v323 = vmul.f32 %v286, 1.442695
      %v324 = vpow.pop %v323
      %v325 = vmul.f32 %v287, 1.442695
      %v326 = vpow.pop %v325
      %v327 = vmul.f32 %v288, 1.442695
      %v328 = vpow.pop %v327
      %v329 = vmul.f32 %v289, 1.442695
      %v330 = vpow.pop %v329
      %v331 = vmul.f32 %v290, 1.442695
      %v332 = vpow.pop %v331
      %v333 = vmul.f32 %v291, 1.442695
      %v334 = vpow.pop %v333
      %v335 = vmul.f32 %v292, 1.442695
      %v336 = vpow.pop %v335
      %v337 = vmul.f32 %v293, 1.442695
      %v338 = vpow.pop %v337
      %v339 = vmul.f32 %v294, 1.442695
      %v340 = vpow.pop %v339
      %v341 = vmul.f32 %v295, 1.442695
      %v342 = vpow.pop %v341
      %v343 = vmul.f32 %v296, 1.442695
      %v344 = vpow.pop %v343
      %v345 = vmul.f32 %v297, 1.442695
      %v346 = vpow.pop %v345
      %v347 = vmul.f32 %v298, 1.442695
      %v348 = vpow.pop %v347
      %v349 = vmul.f32 %v299, 1.442695
      %v350 = vpow.pop %v349
      %v351 = vmul.f32 %v300, 1.442695
      %v352 = vpow.pop %v351
      %v353 = vmul.f32 %v301, 1.442695
      %v354 = vpow.pop %v353
      %v355 = vmul.f32 %v302, 1.442695
      %v356 = vpow.pop %v355
      %v357 = vmul.f32 %v303, 1.442695
      %v358 = vpow.pop %v357
      %v359 = vmul.f32 %v304, 1.442695
      %v360 = vpow.pop %v359
      %v361 = vmul.f32 %v305, 1.442695
      %v362 = vpow.pop %v361
      %v363 = vmul.f32 %v306, 1.442695
      %v364 = vpow.pop %v363
      %v365 = vmul.f32 %v307, 1.442695
      %v366 = vpow.pop %v365
      %v367 = vmul.f32 %v308, 1.442695
      %v368 = vpow.pop %v367
      %v369 = vmul.f32 %v309, 1.442695
      %v370 = vpow.pop %v369
      %v371 = vmul.f32 %v310, 1.442695
      %v372 = vpow.pop %v371
      %v373 = vmul.f32 %v311, 1.442695
      %v374 = vpow.pop %v373
      %v375 = vmul.f32 %v312, 1.442695
      %v376 = vpow.pop %v375
      %v377 = vadd.f32 %v314, 1.0
      %v378 = vadd.f32 %v316, 1.0
      %v379 = vadd.f32 %v318, 1.0
      %v380 = vadd.f32 %v320, 1.0
      %v381 = vadd.f32 %v322, 1.0
      %v382 = vadd.f32 %v324, 1.0
      %v383 = vadd.f32 %v326, 1.0
      %v384 = vadd.f32 %v328, 1.0
      %v385 = vadd.f32 %v330, 1.0
      %v386 = vadd.f32 %v332, 1.0
      %v387 = vadd.f32 %v334, 1.0
      %v388 = vadd.f32 %v336, 1.0
      %v389 = vadd.f32 %v338, 1.0
      %v390 = vadd.f32 %v340, 1.0
      %v391 = vadd.f32 %v342, 1.0
      %v392 = vadd.f32 %v344, 1.0
      %v393 = vadd.f32 %v346, 1.0
      %v394 = vadd.f32 %v348, 1.0
      %v395 = vadd.f32 %v350, 1.0
      %v396 = vadd.f32 %v352, 1.0
      %v397 = vadd.f32 %v354, 1.0
      %v398 = vadd.f32 %v356, 1.0
      %v399 = vadd.f32 %v358, 1.0
      %v400 = vadd.f32 %v360, 1.0
      %v401 = vadd.f32 %v362, 1.0
      %v402 = vadd.f32 %v364, 1.0
      %v403 = vadd.f32 %v366, 1.0
      %v404 = vadd.f32 %v368, 1.0
      %v405 = vadd.f32 %v370, 1.0
      %v406 = vadd.f32 %v372, 1.0
      %v407 = vadd.f32 %v374, 1.0
      %v408 = vadd.f32 %v376, 1.0
      %v409 = vrcp.pop %v377
      %v410 = vmul.f32 %v377, %v409
      %v411 = vsub.f32 1.0, %v410
      %v412 = vmul.f32 %v409, %v411
      %v413 = vadd.f32 %v409, %v412
      %vm414 = vweird.f32 %v377
      %vm415 = vweird.f32 %v409
      %vm416 = vmor %vm414, %vm415
      %v417 = vsel %vm416, %v409, %v413
      %v418 = vand.u32 2147483647, %v377
      %vm419 = vcmp.eq.f32.partialorder %v418, 8.507059e+37
      %v420 = vand.u32 %v377, 2147483648
      %v421 = vor.u32 1.1754944e-38, %v420
      %v422 = vsel %vm419, %v421, %v417
      %v423 = vmul.f32 1.0, %v422
      %v424 = vrcp.pop %v378
      %v425 = vmul.f32 %v378, %v424
      %v426 = vsub.f32 1.0, %v425
      %v427 = vmul.f32 %v424, %v426
      %v428 = vadd.f32 %v424, %v427
      %vm429 = vweird.f32 %v378
      %vm430 = vweird.f32 %v424
      %vm431 = vmor %vm429, %vm430
      %v432 = vsel %vm431, %v424, %v428
      %v433 = vand.u32 2147483647, %v378
      %vm434 = vcmp.eq.f32.partialorder %v433, 8.507059e+37
      %v435 = vand.u32 %v378, 2147483648
      %v436 = vor.u32 1.1754944e-38, %v435
      %v437 = vsel %vm434, %v436, %v432
      %v438 = vmul.f32 1.0, %v437
      %v439 = vrcp.pop %v379
      %v440 = vmul.f32 %v379, %v439
      %v441 = vsub.f32 1.0, %v440
      %v442 = vmul.f32 %v439, %v441
      %v443 = vadd.f32 %v439, %v442
      %vm444 = vweird.f32 %v379
      %vm445 = vweird.f32 %v439
      %vm446 = vmor %vm444, %vm445
      %v447 = vsel %vm446, %v439, %v443
      %v448 = vand.u32 2147483647, %v379
      %vm449 = vcmp.eq.f32.partialorder %v448, 8.507059e+37
      %v450 = vand.u32 %v379, 2147483648
      %v451 = vor.u32 1.1754944e-38, %v450
      %v452 = vsel %vm449, %v451, %v447
      %v453 = vmul.f32 1.0, %v452
      %v454 = vrcp.pop %v380
      %v455 = vmul.f32 %v380, %v454
      %v456 = vsub.f32 1.0, %v455
      %v457 = vmul.f32 %v454, %v456
      %v458 = vadd.f32 %v454, %v457
      %vm459 = vweird.f32 %v380
      %vm460 = vweird.f32 %v454
      %vm461 = vmor %vm459, %vm460
      %v462 = vsel %vm461, %v454, %v458
      %v463 = vand.u32 2147483647, %v380
      %vm464 = vcmp.eq.f32.partialorder %v463, 8.507059e+37
      %v465 = vand.u32 %v380, 2147483648
      %v466 = vor.u32 1.1754944e-38, %v465
      %v467 = vsel %vm464, %v466, %v462
      %v468 = vmul.f32 1.0, %v467
      %v469 = vrcp.pop %v381
      %v470 = vmul.f32 %v381, %v469
      %v471 = vsub.f32 1.0, %v470
      %v472 = vmul.f32 %v469, %v471
      %v473 = vadd.f32 %v469, %v472
      %vm474 = vweird.f32 %v381
      %vm475 = vweird.f32 %v469
      %vm476 = vmor %vm474, %vm475
      %v477 = vsel %vm476, %v469, %v473
      %v478 = vand.u32 2147483647, %v381
      %vm479 = vcmp.eq.f32.partialorder %v478, 8.507059e+37
      %v480 = vand.u32 %v381, 2147483648
      %v481 = vor.u32 1.1754944e-38, %v480
      %v482 = vsel %vm479, %v481, %v477
      %v483 = vmul.f32 1.0, %v482
      %v484 = vrcp.pop %v382
      %v485 = vmul.f32 %v382, %v484
      %v486 = vsub.f32 1.0, %v485
      %v487 = vmul.f32 %v484, %v486
      %v488 = vadd.f32 %v484, %v487
      %vm489 = vweird.f32 %v382
      %vm490 = vweird.f32 %v484
      %vm491 = vmor %vm489, %vm490
      %v492 = vsel %vm491, %v484, %v488
      %v493 = vand.u32 2147483647, %v382
      %vm494 = vcmp.eq.f32.partialorder %v493, 8.507059e+37
      %v495 = vand.u32 %v382, 2147483648
      %v496 = vor.u32 1.1754944e-38, %v495
      %v497 = vsel %vm494, %v496, %v492
      %v498 = vmul.f32 1.0, %v497
      %v499 = vrcp.pop %v383
      %v500 = vmul.f32 %v383, %v499
      %v501 = vsub.f32 1.0, %v500
      %v502 = vmul.f32 %v499, %v501
      %v503 = vadd.f32 %v499, %v502
      %vm504 = vweird.f32 %v383
      %vm505 = vweird.f32 %v499
      %vm506 = vmor %vm504, %vm505
      %v507 = vsel %vm506, %v499, %v503
      %v508 = vand.u32 2147483647, %v383
      %vm509 = vcmp.eq.f32.partialorder %v508, 8.507059e+37
      %v510 = vand.u32 %v383, 2147483648
      %v511 = vor.u32 1.1754944e-38, %v510
      %v512 = vsel %vm509, %v511, %v507
      %v513 = vmul.f32 1.0, %v512
      %v514 = vrcp.pop %v384
      %v515 = vmul.f32 %v384, %v514
      %v516 = vsub.f32 1.0, %v515
      %v517 = vmul.f32 %v514, %v516
      %v518 = vadd.f32 %v514, %v517
      %vm519 = vweird.f32 %v384
      %vm520 = vweird.f32 %v514
      %vm521 = vmor %vm519, %vm520
      %v522 = vsel %vm521, %v514, %v518
      %v523 = vand.u32 2147483647, %v384
      %vm524 = vcmp.eq.f32.partialorder %v523, 8.507059e+37
      %v525 = vand.u32 %v384, 2147483648
      %v526 = vor.u32 1.1754944e-38, %v525
      %v527 = vsel %vm524, %v526, %v522
      %v528 = vmul.f32 1.0, %v527
      %v529 = vrcp.pop %v385
      %v530 = vmul.f32 %v385, %v529
      %v531 = vsub.f32 1.0, %v530
      %v532 = vmul.f32 %v529, %v531
      %v533 = vadd.f32 %v529, %v532
      %vm534 = vweird.f32 %v385
      %vm535 = vweird.f32 %v529
      %vm536 = vmor %vm534, %vm535
      %v537 = vsel %vm536, %v529, %v533
      %v538 = vand.u32 2147483647, %v385
      %vm539 = vcmp.eq.f32.partialorder %v538, 8.507059e+37
      %v540 = vand.u32 %v385, 2147483648
      %v541 = vor.u32 1.1754944e-38, %v540
      %v542 = vsel %vm539, %v541, %v537
      %v543 = vmul.f32 1.0, %v542
      %v544 = vrcp.pop %v386
      %v545 = vmul.f32 %v386, %v544
      %v546 = vsub.f32 1.0, %v545
      %v547 = vmul.f32 %v544, %v546
      %v548 = vadd.f32 %v544, %v547
      %vm549 = vweird.f32 %v386
      %vm550 = vweird.f32 %v544
      %vm551 = vmor %vm549, %vm550
      %v552 = vsel %vm551, %v544, %v548
      %v553 = vand.u32 2147483647, %v386
      %vm554 = vcmp.eq.f32.partialorder %v553, 8.507059e+37
      %v555 = vand.u32 %v386, 2147483648
      %v556 = vor.u32 1.1754944e-38, %v555
      %v557 = vsel %vm554, %v556, %v552
      %v558 = vmul.f32 1.0, %v557
      %v559 = vrcp.pop %v387
      %v560 = vmul.f32 %v387, %v559
      %v561 = vsub.f32 1.0, %v560
      %v562 = vmul.f32 %v559, %v561
      %v563 = vadd.f32 %v559, %v562
      %vm564 = vweird.f32 %v387
      %vm565 = vweird.f32 %v559
      %vm566 = vmor %vm564, %vm565
      %v567 = vsel %vm566, %v559, %v563
      %v568 = vand.u32 2147483647, %v387
      %vm569 = vcmp.eq.f32.partialorder %v568, 8.507059e+37
      %v570 = vand.u32 %v387, 2147483648
      %v571 = vor.u32 1.1754944e-38, %v570
      %v572 = vsel %vm569, %v571, %v567
      %v573 = vmul.f32 1.0, %v572
      %v574 = vrcp.pop %v388
      %v575 = vmul.f32 %v388, %v574
      %v576 = vsub.f32 1.0, %v575
      %v577 = vmul.f32 %v574, %v576
      %v578 = vadd.f32 %v574, %v577
      %vm579 = vweird.f32 %v388
      %vm580 = vweird.f32 %v574
      %vm581 = vmor %vm579, %vm580
      %v582 = vsel %vm581, %v574, %v578
      %v583 = vand.u32 2147483647, %v388
      %vm584 = vcmp.eq.f32.partialorder %v583, 8.507059e+37
      %v585 = vand.u32 %v388, 2147483648
      %v586 = vor.u32 1.1754944e-38, %v585
      %v587 = vsel %vm584, %v586, %v582
      %v588 = vmul.f32 1.0, %v587
      %v589 = vrcp.pop %v389
      %v590 = vmul.f32 %v389, %v589
      %v591 = vsub.f32 1.0, %v590
      %v592 = vmul.f32 %v589, %v591
      %v593 = vadd.f32 %v589, %v592
      %vm594 = vweird.f32 %v389
      %vm595 = vweird.f32 %v589
      %vm596 = vmor %vm594, %vm595
      %v597 = vsel %vm596, %v589, %v593
      %v598 = vand.u32 2147483647, %v389
      %vm599 = vcmp.eq.f32.partialorder %v598, 8.507059e+37
      %v600 = vand.u32 %v389, 2147483648
      %v601 = vor.u32 1.1754944e-38, %v600
      %v602 = vsel %vm599, %v601, %v597
      %v603 = vmul.f32 1.0, %v602
      %v604 = vrcp.pop %v390
      %v605 = vmul.f32 %v390, %v604
      %v606 = vsub.f32 1.0, %v605
      %v607 = vmul.f32 %v604, %v606
      %v608 = vadd.f32 %v604, %v607
      %vm609 = vweird.f32 %v390
      %vm610 = vweird.f32 %v604
      %vm611 = vmor %vm609, %vm610
      %v612 = vsel %vm611, %v604, %v608
      %v613 = vand.u32 2147483647, %v390
      %vm614 = vcmp.eq.f32.partialorder %v613, 8.507059e+37
      %v615 = vand.u32 %v390, 2147483648
      %v616 = vor.u32 1.1754944e-38, %v615
      %v617 = vsel %vm614, %v616, %v612
      %v618 = vmul.f32 1.0, %v617
      %v619 = vrcp.pop %v391
      %v620 = vmul.f32 %v391, %v619
      %v621 = vsub.f32 1.0, %v620
      %v622 = vmul.f32 %v619, %v621
      %v623 = vadd.f32 %v619, %v622
      %vm624 = vweird.f32 %v391
      %vm625 = vweird.f32 %v619
      %vm626 = vmor %vm624, %vm625
      %v627 = vsel %vm626, %v619, %v623
      %v628 = vand.u32 2147483647, %v391
      %vm629 = vcmp.eq.f32.partialorder %v628, 8.507059e+37
      %v630 = vand.u32 %v391, 2147483648
      %v631 = vor.u32 1.1754944e-38, %v630
      %v632 = vsel %vm629, %v631, %v627
      %v633 = vmul.f32 1.0, %v632
      %v634 = vrcp.pop %v392
      %v635 = vmul.f32 %v392, %v634
      %v636 = vsub.f32 1.0, %v635
      %v637 = vmul.f32 %v634, %v636
      %v638 = vadd.f32 %v634, %v637
      %vm639 = vweird.f32 %v392
      %vm640 = vweird.f32 %v634
      %vm641 = vmor %vm639, %vm640
      %v642 = vsel %vm641, %v634, %v638
      %v643 = vand.u32 2147483647, %v392
      %vm644 = vcmp.eq.f32.partialorder %v643, 8.507059e+37
      %v645 = vand.u32 %v392, 2147483648
      %v646 = vor.u32 1.1754944e-38, %v645
      %v647 = vsel %vm644, %v646, %v642
      %v648 = vmul.f32 1.0, %v647
      %v649 = vrcp.pop %v393
      %v650 = vmul.f32 %v393, %v649
      %v651 = vsub.f32 1.0, %v650
      %v652 = vmul.f32 %v649, %v651
      %v653 = vadd.f32 %v649, %v652
      %vm654 = vweird.f32 %v393
      %vm655 = vweird.f32 %v649
      %vm656 = vmor %vm654, %vm655
      %v657 = vsel %vm656, %v649, %v653
      %v658 = vand.u32 2147483647, %v393
      %vm659 = vcmp.eq.f32.partialorder %v658, 8.507059e+37
      %v660 = vand.u32 %v393, 2147483648
      %v661 = vor.u32 1.1754944e-38, %v660
      %v662 = vsel %vm659, %v661, %v657
      %v663 = vmul.f32 1.0, %v662
      %v664 = vrcp.pop %v394
      %v665 = vmul.f32 %v394, %v664
      %v666 = vsub.f32 1.0, %v665
      %v667 = vmul.f32 %v664, %v666
      %v668 = vadd.f32 %v664, %v667
      %vm669 = vweird.f32 %v394
      %vm670 = vweird.f32 %v664
      %vm671 = vmor %vm669, %vm670
      %v672 = vsel %vm671, %v664, %v668
      %v673 = vand.u32 2147483647, %v394
      %vm674 = vcmp.eq.f32.partialorder %v673, 8.507059e+37
      %v675 = vand.u32 %v394, 2147483648
      %v676 = vor.u32 1.1754944e-38, %v675
      %v677 = vsel %vm674, %v676, %v672
      %v678 = vmul.f32 1.0, %v677
      %v679 = vrcp.pop %v395
      %v680 = vmul.f32 %v395, %v679
      %v681 = vsub.f32 1.0, %v680
      %v682 = vmul.f32 %v679, %v681
      %v683 = vadd.f32 %v679, %v682
      %vm684 = vweird.f32 %v395
      %vm685 = vweird.f32 %v679
      %vm686 = vmor %vm684, %vm685
      %v687 = vsel %vm686, %v679, %v683
      %v688 = vand.u32 2147483647, %v395
      %vm689 = vcmp.eq.f32.partialorder %v688, 8.507059e+37
      %v690 = vand.u32 %v395, 2147483648
      %v691 = vor.u32 1.1754944e-38, %v690
      %v692 = vsel %vm689, %v691, %v687
      %v693 = vmul.f32 1.0, %v692
      %v694 = vrcp.pop %v396
      %v695 = vmul.f32 %v396, %v694
      %v696 = vsub.f32 1.0, %v695
      %v697 = vmul.f32 %v694, %v696
      %v698 = vadd.f32 %v694, %v697
      %vm699 = vweird.f32 %v396
      %vm700 = vweird.f32 %v694
      %vm701 = vmor %vm699, %vm700
      %v702 = vsel %vm701, %v694, %v698
      %v703 = vand.u32 2147483647, %v396
      %vm704 = vcmp.eq.f32.partialorder %v703, 8.507059e+37
      %v705 = vand.u32 %v396, 2147483648
      %v706 = vor.u32 1.1754944e-38, %v705
      %v707 = vsel %vm704, %v706, %v702
      %v708 = vmul.f32 1.0, %v707
      %v709 = vrcp.pop %v397
      %v710 = vmul.f32 %v397, %v709
      %v711 = vsub.f32 1.0, %v710
      %v712 = vmul.f32 %v709, %v711
      %v713 = vadd.f32 %v709, %v712
      %vm714 = vweird.f32 %v397
      %vm715 = vweird.f32 %v709
      %vm716 = vmor %vm714, %vm715
      %v717 = vsel %vm716, %v709, %v713
      %v718 = vand.u32 2147483647, %v397
      %vm719 = vcmp.eq.f32.partialorder %v718, 8.507059e+37
      %v720 = vand.u32 %v397, 2147483648
      %v721 = vor.u32 1.1754944e-38, %v720
      %v722 = vsel %vm719, %v721, %v717
      %v723 = vmul.f32 1.0, %v722
      %v724 = vrcp.pop %v398
      %v725 = vmul.f32 %v398, %v724
      %v726 = vsub.f32 1.0, %v725
      %v727 = vmul.f32 %v724, %v726
      %v728 = vadd.f32 %v724, %v727
      %vm729 = vweird.f32 %v398
      %vm730 = vweird.f32 %v724
      %vm731 = vmor %vm729, %vm730
      %v732 = vsel %vm731, %v724, %v728
      %v733 = vand.u32 2147483647, %v398
      %vm734 = vcmp.eq.f32.partialorder %v733, 8.507059e+37
      %v735 = vand.u32 %v398, 2147483648
      %v736 = vor.u32 1.1754944e-38, %v735
      %v737 = vsel %vm734, %v736, %v732
      %v738 = vmul.f32 1.0, %v737
      %v739 = vrcp.pop %v399
      %v740 = vmul.f32 %v399, %v739
      %v741 = vsub.f32 1.0, %v740
      %v742 = vmul.f32 %v739, %v741
      %v743 = vadd.f32 %v739, %v742
      %vm744 = vweird.f32 %v399
      %vm745 = vweird.f32 %v739
      %vm746 = vmor %vm744, %vm745
      %v747 = vsel %vm746, %v739, %v743
      %v748 = vand.u32 2147483647, %v399
      %vm749 = vcmp.eq.f32.partialorder %v748, 8.507059e+37
      %v750 = vand.u32 %v399, 2147483648
      %v751 = vor.u32 1.1754944e-38, %v750
      %v752 = vsel %vm749, %v751, %v747
      %v753 = vmul.f32 1.0, %v752
      %v754 = vrcp.pop %v400
      %v755 = vmul.f32 %v400, %v754
      %v756 = vsub.f32 1.0, %v755
      %v757 = vmul.f32 %v754, %v756
      %v758 = vadd.f32 %v754, %v757
      %vm759 = vweird.f32 %v400
      %vm760 = vweird.f32 %v754
      %vm761 = vmor %vm759, %vm760
      %v762 = vsel %vm761, %v754, %v758
      %v763 = vand.u32 2147483647, %v400
      %vm764 = vcmp.eq.f32.partialorder %v763, 8.507059e+37
      %v765 = vand.u32 %v400, 2147483648
      %v766 = vor.u32 1.1754944e-38, %v765
      %v767 = vsel %vm764, %v766, %v762
      %v768 = vmul.f32 1.0, %v767
      %v769 = vrcp.pop %v401
      %v770 = vmul.f32 %v401, %v769
      %v771 = vsub.f32 1.0, %v770
      %v772 = vmul.f32 %v769, %v771
      %v773 = vadd.f32 %v769, %v772
      %vm774 = vweird.f32 %v401
      %vm775 = vweird.f32 %v769
      %vm776 = vmor %vm774, %vm775
      %v777 = vsel %vm776, %v769, %v773
      %v778 = vand.u32 2147483647, %v401
      %vm779 = vcmp.eq.f32.partialorder %v778, 8.507059e+37
      %v780 = vand.u32 %v401, 2147483648
      %v781 = vor.u32 1.1754944e-38, %v780
      %v782 = vsel %vm779, %v781, %v777
      %v783 = vmul.f32 1.0, %v782
      %v784 = vrcp.pop %v402
      %v785 = vmul.f32 %v402, %v784
      %v786 = vsub.f32 1.0, %v785
      %v787 = vmul.f32 %v784, %v786
      %v788 = vadd.f32 %v784, %v787
      %vm789 = vweird.f32 %v402
      %vm790 = vweird.f32 %v784
      %vm791 = vmor %vm789, %vm790
      %v792 = vsel %vm791, %v784, %v788
      %v793 = vand.u32 2147483647, %v402
      %vm794 = vcmp.eq.f32.partialorder %v793, 8.507059e+37
      %v795 = vand.u32 %v402, 2147483648
      %v796 = vor.u32 1.1754944e-38, %v795
      %v797 = vsel %vm794, %v796, %v792
      %v798 = vmul.f32 1.0, %v797
      %v799 = vrcp.pop %v403
      %v800 = vmul.f32 %v403, %v799
      %v801 = vsub.f32 1.0, %v800
      %v802 = vmul.f32 %v799, %v801
      %v803 = vadd.f32 %v799, %v802
      %vm804 = vweird.f32 %v403
      %vm805 = vweird.f32 %v799
      %vm806 = vmor %vm804, %vm805
      %v807 = vsel %vm806, %v799, %v803
      %v808 = vand.u32 2147483647, %v403
      %vm809 = vcmp.eq.f32.partialorder %v808, 8.507059e+37
      %v810 = vand.u32 %v403, 2147483648
      %v811 = vor.u32 1.1754944e-38, %v810
      %v812 = vsel %vm809, %v811, %v807
      %v813 = vmul.f32 1.0, %v812
      %v814 = vrcp.pop %v404
      %v815 = vmul.f32 %v404, %v814
      %v816 = vsub.f32 1.0, %v815
      %v817 = vmul.f32 %v814, %v816
      %v818 = vadd.f32 %v814, %v817
      %vm819 = vweird.f32 %v404
      %vm820 = vweird.f32 %v814
      %vm821 = vmor %vm819, %vm820
      %v822 = vsel %vm821, %v814, %v818
      %v823 = vand.u32 2147483647, %v404
      %vm824 = vcmp.eq.f32.partialorder %v823, 8.507059e+37
      %v825 = vand.u32 %v404, 2147483648
      %v826 = vor.u32 1.1754944e-38, %v825
      %v827 = vsel %vm824, %v826, %v822
      %v828 = vmul.f32 1.0, %v827
      %v829 = vrcp.pop %v405
      %v830 = vmul.f32 %v405, %v829
      %v831 = vsub.f32 1.0, %v830
      %v832 = vmul.f32 %v829, %v831
      %v833 = vadd.f32 %v829, %v832
      %vm834 = vweird.f32 %v405
      %vm835 = vweird.f32 %v829
      %vm836 = vmor %vm834, %vm835
      %v837 = vsel %vm836, %v829, %v833
      %v838 = vand.u32 2147483647, %v405
      %vm839 = vcmp.eq.f32.partialorder %v838, 8.507059e+37
      %v840 = vand.u32 %v405, 2147483648
      %v841 = vor.u32 1.1754944e-38, %v840
      %v842 = vsel %vm839, %v841, %v837
      %v843 = vmul.f32 1.0, %v842
      %v844 = vrcp.pop %v406
      %v845 = vmul.f32 %v406, %v844
      %v846 = vsub.f32 1.0, %v845
      %v847 = vmul.f32 %v844, %v846
      %v848 = vadd.f32 %v844, %v847
      %vm849 = vweird.f32 %v406
      %vm850 = vweird.f32 %v844
      %vm851 = vmor %vm849, %vm850
      %v852 = vsel %vm851, %v844, %v848
      %v853 = vand.u32 2147483647, %v406
      %vm854 = vcmp.eq.f32.partialorder %v853, 8.507059e+37
      %v855 = vand.u32 %v406, 2147483648
      %v856 = vor.u32 1.1754944e-38, %v855
      %v857 = vsel %vm854, %v856, %v852
      %v858 = vmul.f32 1.0, %v857
      %v859 = vrcp.pop %v407
      %v860 = vmul.f32 %v407, %v859
      %v861 = vsub.f32 1.0, %v860
      %v862 = vmul.f32 %v859, %v861
      %v863 = vadd.f32 %v859, %v862
      %vm864 = vweird.f32 %v407
      %vm865 = vweird.f32 %v859
      %vm866 = vmor %vm864, %vm865
      %v867 = vsel %vm866, %v859, %v863
      %v868 = vand.u32 2147483647, %v407
      %vm869 = vcmp.eq.f32.partialorder %v868, 8.507059e+37
      %v870 = vand.u32 %v407, 2147483648
      %v871 = vor.u32 1.1754944e-38, %v870
      %v872 = vsel %vm869, %v871, %v867
      %v873 = vmul.f32 1.0, %v872
      %v874 = vrcp.pop %v408
      %v875 = vmul.f32 %v408, %v874
      %v876 = vsub.f32 1.0, %v875
      %v877 = vmul.f32 %v874, %v876
      %v878 = vadd.f32 %v874, %v877
      %vm879 = vweird.f32 %v408
      %vm880 = vweird.f32 %v874
      %vm881 = vmor %vm879, %vm880
      %v882 = vsel %vm881, %v874, %v878
      %v883 = vand.u32 2147483647, %v408
      %vm884 = vcmp.eq.f32.partialorder %v883, 8.507059e+37
      %v885 = vand.u32 %v408, 2147483648
      %v886 = vor.u32 1.1754944e-38, %v885
      %v887 = vsel %vm884, %v886, %v882
      %v888 = vmul.f32 1.0, %v887
      %v889 = vmul.f32 %v423, 1.8462286
      %v890 = vmul.f32 %v438, 1.8462286
      %v891 = vmul.f32 %v453, 1.8462286
      %v892 = vmul.f32 %v468, 1.8462286
      %v893 = vmul.f32 %v483, 1.8462286
      %v894 = vmul.f32 %v498, 1.8462286
      %v895 = vmul.f32 %v513, 1.8462286
      %v896 = vmul.f32 %v528, 1.8462286
      %v897 = vmul.f32 %v543, 1.8462286
      %v898 = vmul.f32 %v558, 1.8462286
      %v899 = vmul.f32 %v573, 1.8462286
      %v900 = vmul.f32 %v588, 1.8462286
      %v901 = vmul.f32 %v603, 1.8462286
      %v902 = vmul.f32 %v618, 1.8462286
      %v903 = vmul.f32 %v633, 1.8462286
      %v904 = vmul.f32 %v648, 1.8462286
      %v905 = vmul.f32 %v663, 1.8462286
      %v906 = vmul.f32 %v678, 1.8462286
      %v907 = vmul.f32 %v693, 1.8462286
      %v908 = vmul.f32 %v708, 1.8462286
      %v909 = vmul.f32 %v723, 1.8462286
      %v910 = vmul.f32 %v738, 1.8462286
      %v911 = vmul.f32 %v753, 1.8462286
      %v912 = vmul.f32 %v768, 1.8462286
      %v913 = vmul.f32 %v783, 1.8462286
      %v914 = vmul.f32 %v798, 1.8462286
      %v915 = vmul.f32 %v813, 1.8462286
      %v916 = vmul.f32 %v828, 1.8462286
      %v917 = vmul.f32 %v843, 1.8462286
      %v918 = vmul.f32 %v858, 1.8462286
      %v919 = vmul.f32 %v873, 1.8462286
      %v920 = vmul.f32 %v888, 1.8462286
      %922 = vset.pattern.permute.xlu0 17
      %923 = vperm.xlu0 %922, %v889
      %v924 = vpop.permute.xlu0 %923
      %927 = vset.pattern.permute.xlu0 17
      %928 = vperm.xlu0 %927, %v890
      %v929 = vpop.permute.xlu0 %928
      %932 = vset.pattern.permute.xlu0 17
      %933 = vperm.xlu0 %932, %v891
      %v934 = vpop.permute.xlu0 %933
      %937 = vset.pattern.permute.xlu0 17
      %938 = vperm.xlu0 %937, %v892
      %v939 = vpop.permute.xlu0 %938
      %942 = vset.pattern.permute.xlu0 17
      %943 = vperm.xlu0 %942, %v893
      %v944 = vpop.permute.xlu0 %943
      %947 = vset.pattern.permute.xlu0 17
      %948 = vperm.xlu0 %947, %v894
      %v949 = vpop.permute.xlu0 %948
      %952 = vset.pattern.permute.xlu0 17
      %953 = vperm.xlu0 %952, %v895
      %v954 = vpop.permute.xlu0 %953
      %957 = vset.pattern.permute.xlu0 17
      %958 = vperm.xlu0 %957, %v896
      %v959 = vpop.permute.xlu0 %958
      %962 = vset.pattern.permute.xlu0 17
      %963 = vperm.xlu0 %962, %v897
      %v964 = vpop.permute.xlu0 %963
      %967 = vset.pattern.permute.xlu0 17
      %968 = vperm.xlu0 %967, %v898
      %v969 = vpop.permute.xlu0 %968
      %972 = vset.pattern.permute.xlu0 17
      %973 = vperm.xlu0 %972, %v899
      %v974 = vpop.permute.xlu0 %973
      %977 = vset.pattern.permute.xlu0 17
      %978 = vperm.xlu0 %977, %v900
      %v979 = vpop.permute.xlu0 %978
      %982 = vset.pattern.permute.xlu0 17
      %983 = vperm.xlu0 %982, %v901
      %v984 = vpop.permute.xlu0 %983
      %987 = vset.pattern.permute.xlu0 17
      %988 = vperm.xlu0 %987, %v902
      %v989 = vpop.permute.xlu0 %988
      %992 = vset.pattern.permute.xlu0 17
      %993 = vperm.xlu0 %992, %v903
      %v994 = vpop.permute.xlu0 %993
      %997 = vset.pattern.permute.xlu0 17
      %998 = vperm.xlu0 %997, %v904
      %v999 = vpop.permute.xlu0 %998
      %1002 = vset.pattern.permute.xlu0 17
      %1003 = vperm.xlu0 %1002, %v905
      %v1004 = vpop.permute.xlu0 %1003
      %1007 = vset.pattern.permute.xlu0 17
      %1008 = vperm.xlu0 %1007, %v906
      %v1009 = vpop.permute.xlu0 %1008
      %1012 = vset.pattern.permute.xlu0 17
      %1013 = vperm.xlu0 %1012, %v907
      %v1014 = vpop.permute.xlu0 %1013
      %1017 = vset.pattern.permute.xlu0 17
      %1018 = vperm.xlu0 %1017, %v908
      %v1019 = vpop.permute.xlu0 %1018
      %1022 = vset.pattern.permute.xlu0 17
      %1023 = vperm.xlu0 %1022, %v909
      %v1024 = vpop.permute.xlu0 %1023
      %1027 = vset.pattern.permute.xlu0 17
      %1028 = vperm.xlu0 %1027, %v910
      %v1029 = vpop.permute.xlu0 %1028
      %1032 = vset.pattern.permute.xlu0 17
      %1033 = vperm.xlu0 %1032, %v911
      %v1034 = vpop.permute.xlu0 %1033
      %1037 = vset.pattern.permute.xlu0 17
      %1038 = vperm.xlu0 %1037, %v912
      %v1039 = vpop.permute.xlu0 %1038
      %1042 = vset.pattern.permute.xlu0 17
      %1043 = vperm.xlu0 %1042, %v913
      %v1044 = vpop.permute.xlu0 %1043
      %1047 = vset.pattern.permute.xlu0 17
      %1048 = vperm.xlu0 %1047, %v914
      %v1049 = vpop.permute.xlu0 %1048
      %1052 = vset.pattern.permute.xlu0 17
      %1053 = vperm.xlu0 %1052, %v915
      %v1054 = vpop.permute.xlu0 %1053
      %1057 = vset.pattern.permute.xlu0 17
      %1058 = vperm.xlu0 %1057, %v916
      %v1059 = vpop.permute.xlu0 %1058
      %1062 = vset.pattern.permute.xlu0 17
      %1063 = vperm.xlu0 %1062, %v917
      %v1064 = vpop.permute.xlu0 %1063
      %1067 = vset.pattern.permute.xlu0 17
      %1068 = vperm.xlu0 %1067, %v918
      %v1069 = vpop.permute.xlu0 %1068
      %1072 = vset.pattern.permute.xlu0 17
      %1073 = vperm.xlu0 %1072, %v919
      %v1074 = vpop.permute.xlu0 %1073
      %1077 = vset.pattern.permute.xlu0 17
      %1078 = vperm.xlu0 %1077, %v920
      %v1079 = vpop.permute.xlu0 %1078
      %1081 = vset.pattern.permute.xlu0 16
      %1082 = vperm.xlu0 %1081, %v889
      %v1083 = vpop.permute.xlu0 %1082
      %1085 = vset.pattern.permute.xlu0 16
      %1086 = vperm.xlu0 %1085, %v890
      %v1087 = vpop.permute.xlu0 %1086
      %1089 = vset.pattern.permute.xlu0 16
      %1090 = vperm.xlu0 %1089, %v891
      %v1091 = vpop.permute.xlu0 %1090
      %1093 = vset.pattern.permute.xlu0 16
      %1094 = vperm.xlu0 %1093, %v892
      %v1095 = vpop.permute.xlu0 %1094
      %1097 = vset.pattern.permute.xlu0 16
      %1098 = vperm.xlu0 %1097, %v893
      %v1099 = vpop.permute.xlu0 %1098
      %1101 = vset.pattern.permute.xlu0 16
      %1102 = vperm.xlu0 %1101, %v894
      %v1103 = vpop.permute.xlu0 %1102
      %1105 = vset.pattern.permute.xlu0 16
      %1106 = vperm.xlu0 %1105, %v895
      %v1107 = vpop.permute.xlu0 %1106
      %1109 = vset.pattern.permute.xlu0 16
      %1110 = vperm.xlu0 %1109, %v896
      %v1111 = vpop.permute.xlu0 %1110
      %1113 = vset.pattern.permute.xlu0 16
      %1114 = vperm.xlu0 %1113, %v897
      %v1115 = vpop.permute.xlu0 %1114
      %1117 = vset.pattern.permute.xlu0 16
      %1118 = vperm.xlu0 %1117, %v898
      %v1119 = vpop.permute.xlu0 %1118
      %1121 = vset.pattern.permute.xlu0 16
      %1122 = vperm.xlu0 %1121, %v899
      %v1123 = vpop.permute.xlu0 %1122
      %1125 = vset.pattern.permute.xlu0 16
      %1126 = vperm.xlu0 %1125, %v900
      %v1127 = vpop.permute.xlu0 %1126
      %1129 = vset.pattern.permute.xlu0 16
      %1130 = vperm.xlu0 %1129, %v901
      %v1131 = vpop.permute.xlu0 %1130
      %1133 = vset.pattern.permute.xlu0 16
      %1134 = vperm.xlu0 %1133, %v902
      %v1135 = vpop.permute.xlu0 %1134
      %1137 = vset.pattern.permute.xlu0 16
      %1138 = vperm.xlu0 %1137, %v903
      %v1139 = vpop.permute.xlu0 %1138
      %1141 = vset.pattern.permute.xlu0 16
      %1142 = vperm.xlu0 %1141, %v904
      %v1143 = vpop.permute.xlu0 %1142
      %1145 = vset.pattern.permute.xlu0 16
      %1146 = vperm.xlu0 %1145, %v905
      %v1147 = vpop.permute.xlu0 %1146
      %1149 = vset.pattern.permute.xlu0 16
      %1150 = vperm.xlu0 %1149, %v906
      %v1151 = vpop.permute.xlu0 %1150
      %1153 = vset.pattern.permute.xlu0 16
      %1154 = vperm.xlu0 %1153, %v907
      %v1155 = vpop.permute.xlu0 %1154
      %1157 = vset.pattern.permute.xlu0 16
      %1158 = vperm.xlu0 %1157, %v908
      %v1159 = vpop.permute.xlu0 %1158
      %1161 = vset.pattern.permute.xlu0 16
      %1162 = vperm.xlu0 %1161, %v909
      %v1163 = vpop.permute.xlu0 %1162
      %1165 = vset.pattern.permute.xlu0 16
      %1166 = vperm.xlu0 %1165, %v910
      %v1167 = vpop.permute.xlu0 %1166
      %1169 = vset.pattern.permute.xlu0 16
      %1170 = vperm.xlu0 %1169, %v911
      %v1171 = vpop.permute.xlu0 %1170
      %1173 = vset.pattern.permute.xlu0 16
      %1174 = vperm.xlu0 %1173, %v912
      %v1175 = vpop.permute.xlu0 %1174
      %1177 = vset.pattern.permute.xlu0 16
      %1178 = vperm.xlu0 %1177, %v913
      %v1179 = vpop.permute.xlu0 %1178
      %1181 = vset.pattern.permute.xlu0 16
      %1182 = vperm.xlu0 %1181, %v914
      %v1183 = vpop.permute.xlu0 %1182
      %1185 = vset.pattern.permute.xlu0 16
      %1186 = vperm.xlu0 %1185, %v915
      %v1187 = vpop.permute.xlu0 %1186
      %1189 = vset.pattern.permute.xlu0 16
      %1190 = vperm.xlu0 %1189, %v916
      %v1191 = vpop.permute.xlu0 %1190
      %1193 = vset.pattern.permute.xlu0 16
      %1194 = vperm.xlu0 %1193, %v917
      %v1195 = vpop.permute.xlu0 %1194
      %1197 = vset.pattern.permute.xlu0 16
      %1198 = vperm.xlu0 %1197, %v918
      %v1199 = vpop.permute.xlu0 %1198
      %1201 = vset.pattern.permute.xlu0 16
      %1202 = vperm.xlu0 %1201, %v919
      %v1203 = vpop.permute.xlu0 %1202
      %1205 = vset.pattern.permute.xlu0 16
      %1206 = vperm.xlu0 %1205, %v920
      %v1207 = vpop.permute.xlu0 %1206
      %v1209 = vsel %vm15, %v1083, %v924
      %v1210 = vsel %vm15, %v1087, %v929
      %v1211 = vsel %vm15, %v1091, %v934
      %v1212 = vsel %vm15, %v1095, %v939
      %v1213 = vsel %vm15, %v1099, %v944
      %v1214 = vsel %vm15, %v1103, %v949
      %v1215 = vsel %vm15, %v1107, %v954
      %v1216 = vsel %vm15, %v1111, %v959
      %v1217 = vsel %vm15, %v1115, %v964
      %v1218 = vsel %vm15, %v1119, %v969
      %v1219 = vsel %vm15, %v1123, %v974
      %v1220 = vsel %vm15, %v1127, %v979
      %v1221 = vsel %vm15, %v1131, %v984
      %v1222 = vsel %vm15, %v1135, %v989
      %v1223 = vsel %vm15, %v1139, %v994
      %v1224 = vsel %vm15, %v1143, %v999
      %v1225 = vsel %vm15, %v1147, %v1004
      %v1226 = vsel %vm15, %v1151, %v1009
      %v1227 = vsel %vm15, %v1155, %v1014
      %v1228 = vsel %vm15, %v1159, %v1019
      %v1229 = vsel %vm15, %v1163, %v1024
      %v1230 = vsel %vm15, %v1167, %v1029
      %v1231 = vsel %vm15, %v1171, %v1034
      %v1232 = vsel %vm15, %v1175, %v1039
      %v1233 = vsel %vm15, %v1179, %v1044
      %v1234 = vsel %vm15, %v1183, %v1049
      %v1235 = vsel %vm15, %v1187, %v1054
      %v1236 = vsel %vm15, %v1191, %v1059
      %v1237 = vsel %vm15, %v1195, %v1064
      %v1238 = vsel %vm15, %v1199, %v1069
      %v1239 = vsel %vm15, %v1203, %v1074
      %v1240 = vsel %vm15, %v1207, %v1079
      %1241 = vset.pattern.permute.xlu0 15
      %1242 = vperm.xlu0 %1241, %v889
      %v1243 = vpop.permute.xlu0 %1242
      %1245 = vset.pattern.permute.xlu0 15
      %1246 = vperm.xlu0 %1245, %v890
      %v1247 = vpop.permute.xlu0 %1246
      %1249 = vset.pattern.permute.xlu0 15
      %1250 = vperm.xlu0 %1249, %v891
      %v1251 = vpop.permute.xlu0 %1250
      %1253 = vset.pattern.permute.xlu0 15
      %1254 = vperm.xlu0 %1253, %v892
      %v1255 = vpop.permute.xlu0 %1254
      %1257 = vset.pattern.permute.xlu0 15
      %1258 = vperm.xlu0 %1257, %v893
      %v1259 = vpop.permute.xlu0 %1258
      %1261 = vset.pattern.permute.xlu0 15
      %1262 = vperm.xlu0 %1261, %v894
      %v1263 = vpop.permute.xlu0 %1262
      %1265 = vset.pattern.permute.xlu0 15
      %1266 = vperm.xlu0 %1265, %v895
      %v1267 = vpop.permute.xlu0 %1266
      %1269 = vset.pattern.permute.xlu0 15
      %1270 = vperm.xlu0 %1269, %v896
      %v1271 = vpop.permute.xlu0 %1270
      %1273 = vset.pattern.permute.xlu0 15
      %1274 = vperm.xlu0 %1273, %v897
      %v1275 = vpop.permute.xlu0 %1274
      %1277 = vset.pattern.permute.xlu0 15
      %1278 = vperm.xlu0 %1277, %v898
      %v1279 = vpop.permute.xlu0 %1278
      %1281 = vset.pattern.permute.xlu0 15
      %1282 = vperm.xlu0 %1281, %v899
      %v1283 = vpop.permute.xlu0 %1282
      %1285 = vset.pattern.permute.xlu0 15
      %1286 = vperm.xlu0 %1285, %v900
      %v1287 = vpop.permute.xlu0 %1286
      %1289 = vset.pattern.permute.xlu0 15
      %1290 = vperm.xlu0 %1289, %v901
      %v1291 = vpop.permute.xlu0 %1290
      %1293 = vset.pattern.permute.xlu0 15
      %1294 = vperm.xlu0 %1293, %v902
      %v1295 = vpop.permute.xlu0 %1294
      %1297 = vset.pattern.permute.xlu0 15
      %1298 = vperm.xlu0 %1297, %v903
      %v1299 = vpop.permute.xlu0 %1298
      %1301 = vset.pattern.permute.xlu0 15
      %1302 = vperm.xlu0 %1301, %v904
      %v1303 = vpop.permute.xlu0 %1302
      %1305 = vset.pattern.permute.xlu0 15
      %1306 = vperm.xlu0 %1305, %v905
      %v1307 = vpop.permute.xlu0 %1306
      %1309 = vset.pattern.permute.xlu0 15
      %1310 = vperm.xlu0 %1309, %v906
      %v1311 = vpop.permute.xlu0 %1310
      %1313 = vset.pattern.permute.xlu0 15
      %1314 = vperm.xlu0 %1313, %v907
      %v1315 = vpop.permute.xlu0 %1314
      %1317 = vset.pattern.permute.xlu0 15
      %1318 = vperm.xlu0 %1317, %v908
      %v1319 = vpop.permute.xlu0 %1318
      %1321 = vset.pattern.permute.xlu0 15
      %1322 = vperm.xlu0 %1321, %v909
      %v1323 = vpop.permute.xlu0 %1322
      %1325 = vset.pattern.permute.xlu0 15
      %1326 = vperm.xlu0 %1325, %v910
      %v1327 = vpop.permute.xlu0 %1326
      %1329 = vset.pattern.permute.xlu0 15
      %1330 = vperm.xlu0 %1329, %v911
      %v1331 = vpop.permute.xlu0 %1330
      %1333 = vset.pattern.permute.xlu0 15
      %1334 = vperm.xlu0 %1333, %v912
      %v1335 = vpop.permute.xlu0 %1334
      %1337 = vset.pattern.permute.xlu0 15
      %1338 = vperm.xlu0 %1337, %v913
      %v1339 = vpop.permute.xlu0 %1338
      %1341 = vset.pattern.permute.xlu0 15
      %1342 = vperm.xlu0 %1341, %v914
      %v1343 = vpop.permute.xlu0 %1342
      %1345 = vset.pattern.permute.xlu0 15
      %1346 = vperm.xlu0 %1345, %v915
      %v1347 = vpop.permute.xlu0 %1346
      %1349 = vset.pattern.permute.xlu0 15
      %1350 = vperm.xlu0 %1349, %v916
      %v1351 = vpop.permute.xlu0 %1350
      %1353 = vset.pattern.permute.xlu0 15
      %1354 = vperm.xlu0 %1353, %v917
      %v1355 = vpop.permute.xlu0 %1354
      %1357 = vset.pattern.permute.xlu0 15
      %1358 = vperm.xlu0 %1357, %v918
      %v1359 = vpop.permute.xlu0 %1358
      %1361 = vset.pattern.permute.xlu0 15
      %1362 = vperm.xlu0 %1361, %v919
      %v1363 = vpop.permute.xlu0 %1362
      %1365 = vset.pattern.permute.xlu0 15
      %1366 = vperm.xlu0 %1365, %v920
      %v1367 = vpop.permute.xlu0 %1366
      %v1369 = vsel %vm14, %v1243, %v1209
      %v1370 = vsel %vm14, %v1247, %v1210
      %v1371 = vsel %vm14, %v1251, %v1211
      %v1372 = vsel %vm14, %v1255, %v1212
      %v1373 = vsel %vm14, %v1259, %v1213
      %v1374 = vsel %vm14, %v1263, %v1214
      %v1375 = vsel %vm14, %v1267, %v1215
      %v1376 = vsel %vm14, %v1271, %v1216
      %v1377 = vsel %vm14, %v1275, %v1217
      %v1378 = vsel %vm14, %v1279, %v1218
      %v1379 = vsel %vm14, %v1283, %v1219
      %v1380 = vsel %vm14, %v1287, %v1220
      %v1381 = vsel %vm14, %v1291, %v1221
      %v1382 = vsel %vm14, %v1295, %v1222
      %v1383 = vsel %vm14, %v1299, %v1223
      %v1384 = vsel %vm14, %v1303, %v1224
      %v1385 = vsel %vm14, %v1307, %v1225
      %v1386 = vsel %vm14, %v1311, %v1226
      %v1387 = vsel %vm14, %v1315, %v1227
      %v1388 = vsel %vm14, %v1319, %v1228
      %v1389 = vsel %vm14, %v1323, %v1229
      %v1390 = vsel %vm14, %v1327, %v1230
      %v1391 = vsel %vm14, %v1331, %v1231
      %v1392 = vsel %vm14, %v1335, %v1232
      %v1393 = vsel %vm14, %v1339, %v1233
      %v1394 = vsel %vm14, %v1343, %v1234
      %v1395 = vsel %vm14, %v1347, %v1235
      %v1396 = vsel %vm14, %v1351, %v1236
      %v1397 = vsel %vm14, %v1355, %v1237
      %v1398 = vsel %vm14, %v1359, %v1238
      %v1399 = vsel %vm14, %v1363, %v1239
      %v1400 = vsel %vm14, %v1367, %v1240
      %1401 = vset.pattern.permute.xlu0 14
      %1402 = vperm.xlu0 %1401, %v889
      %v1403 = vpop.permute.xlu0 %1402
      %1405 = vset.pattern.permute.xlu0 14
      %1406 = vperm.xlu0 %1405, %v890
      %v1407 = vpop.permute.xlu0 %1406
      %1409 = vset.pattern.permute.xlu0 14
      %1410 = vperm.xlu0 %1409, %v891
      %v1411 = vpop.permute.xlu0 %1410
      %1413 = vset.pattern.permute.xlu0 14
      %1414 = vperm.xlu0 %1413, %v892
      %v1415 = vpop.permute.xlu0 %1414
      %1417 = vset.pattern.permute.xlu0 14
      %1418 = vperm.xlu0 %1417, %v893
      %v1419 = vpop.permute.xlu0 %1418
      %1421 = vset.pattern.permute.xlu0 14
      %1422 = vperm.xlu0 %1421, %v894
      %v1423 = vpop.permute.xlu0 %1422
      %1425 = vset.pattern.permute.xlu0 14
      %1426 = vperm.xlu0 %1425, %v895
      %v1427 = vpop.permute.xlu0 %1426
      %1429 = vset.pattern.permute.xlu0 14
      %1430 = vperm.xlu0 %1429, %v896
      %v1431 = vpop.permute.xlu0 %1430
      %1433 = vset.pattern.permute.xlu0 14
      %1434 = vperm.xlu0 %1433, %v897
      %v1435 = vpop.permute.xlu0 %1434
      %1437 = vset.pattern.permute.xlu0 14
      %1438 = vperm.xlu0 %1437, %v898
      %v1439 = vpop.permute.xlu0 %1438
      %1441 = vset.pattern.permute.xlu0 14
      %1442 = vperm.xlu0 %1441, %v899
      %v1443 = vpop.permute.xlu0 %1442
      %1445 = vset.pattern.permute.xlu0 14
      %1446 = vperm.xlu0 %1445, %v900
      %v1447 = vpop.permute.xlu0 %1446
      %1449 = vset.pattern.permute.xlu0 14
      %1450 = vperm.xlu0 %1449, %v901
      %v1451 = vpop.permute.xlu0 %1450
      %1453 = vset.pattern.permute.xlu0 14
      %1454 = vperm.xlu0 %1453, %v902
      %v1455 = vpop.permute.xlu0 %1454
      %1457 = vset.pattern.permute.xlu0 14
      %1458 = vperm.xlu0 %1457, %v903
      %v1459 = vpop.permute.xlu0 %1458
      %1461 = vset.pattern.permute.xlu0 14
      %1462 = vperm.xlu0 %1461, %v904
      %v1463 = vpop.permute.xlu0 %1462
      %1465 = vset.pattern.permute.xlu0 14
      %1466 = vperm.xlu0 %1465, %v905
      %v1467 = vpop.permute.xlu0 %1466
      %1469 = vset.pattern.permute.xlu0 14
      %1470 = vperm.xlu0 %1469, %v906
      %v1471 = vpop.permute.xlu0 %1470
      %1473 = vset.pattern.permute.xlu0 14
      %1474 = vperm.xlu0 %1473, %v907
      %v1475 = vpop.permute.xlu0 %1474
      %1477 = vset.pattern.permute.xlu0 14
      %1478 = vperm.xlu0 %1477, %v908
      %v1479 = vpop.permute.xlu0 %1478
      %1481 = vset.pattern.permute.xlu0 14
      %1482 = vperm.xlu0 %1481, %v909
      %v1483 = vpop.permute.xlu0 %1482
      %1485 = vset.pattern.permute.xlu0 14
      %1486 = vperm.xlu0 %1485, %v910
      %v1487 = vpop.permute.xlu0 %1486
      %1489 = vset.pattern.permute.xlu0 14
      %1490 = vperm.xlu0 %1489, %v911
      %v1491 = vpop.permute.xlu0 %1490
      %1493 = vset.pattern.permute.xlu0 14
      %1494 = vperm.xlu0 %1493, %v912
      %v1495 = vpop.permute.xlu0 %1494
      %1497 = vset.pattern.permute.xlu0 14
      %1498 = vperm.xlu0 %1497, %v913
      %v1499 = vpop.permute.xlu0 %1498
      %1501 = vset.pattern.permute.xlu0 14
      %1502 = vperm.xlu0 %1501, %v914
      %v1503 = vpop.permute.xlu0 %1502
      %1505 = vset.pattern.permute.xlu0 14
      %1506 = vperm.xlu0 %1505, %v915
      %v1507 = vpop.permute.xlu0 %1506
      %1509 = vset.pattern.permute.xlu0 14
      %1510 = vperm.xlu0 %1509, %v916
      %v1511 = vpop.permute.xlu0 %1510
      %1513 = vset.pattern.permute.xlu0 14
      %1514 = vperm.xlu0 %1513, %v917
      %v1515 = vpop.permute.xlu0 %1514
      %1517 = vset.pattern.permute.xlu0 14
      %1518 = vperm.xlu0 %1517, %v918
      %v1519 = vpop.permute.xlu0 %1518
      %1521 = vset.pattern.permute.xlu0 14
      %1522 = vperm.xlu0 %1521, %v919
      %v1523 = vpop.permute.xlu0 %1522
      %1525 = vset.pattern.permute.xlu0 14
      %1526 = vperm.xlu0 %1525, %v920
      %v1527 = vpop.permute.xlu0 %1526
      %v1529 = vsel %vm13, %v1403, %v1369
      %v1530 = vsel %vm13, %v1407, %v1370
      %v1531 = vsel %vm13, %v1411, %v1371
      %v1532 = vsel %vm13, %v1415, %v1372
      %v1533 = vsel %vm13, %v1419, %v1373
      %v1534 = vsel %vm13, %v1423, %v1374
      %v1535 = vsel %vm13, %v1427, %v1375
      %v1536 = vsel %vm13, %v1431, %v1376
      %v1537 = vsel %vm13, %v1435, %v1377
      %v1538 = vsel %vm13, %v1439, %v1378
      %v1539 = vsel %vm13, %v1443, %v1379
      %v1540 = vsel %vm13, %v1447, %v1380
      %v1541 = vsel %vm13, %v1451, %v1381
      %v1542 = vsel %vm13, %v1455, %v1382
      %v1543 = vsel %vm13, %v1459, %v1383
      %v1544 = vsel %vm13, %v1463, %v1384
      %v1545 = vsel %vm13, %v1467, %v1385
      %v1546 = vsel %vm13, %v1471, %v1386
      %v1547 = vsel %vm13, %v1475, %v1387
      %v1548 = vsel %vm13, %v1479, %v1388
      %v1549 = vsel %vm13, %v1483, %v1389
      %v1550 = vsel %vm13, %v1487, %v1390
      %v1551 = vsel %vm13, %v1491, %v1391
      %v1552 = vsel %vm13, %v1495, %v1392
      %v1553 = vsel %vm13, %v1499, %v1393
      %v1554 = vsel %vm13, %v1503, %v1394
      %v1555 = vsel %vm13, %v1507, %v1395
      %v1556 = vsel %vm13, %v1511, %v1396
      %v1557 = vsel %vm13, %v1515, %v1397
      %v1558 = vsel %vm13, %v1519, %v1398
      %v1559 = vsel %vm13, %v1523, %v1399
      %v1560 = vsel %vm13, %v1527, %v1400
      %1561 = vset.pattern.permute.xlu0 13
      %1562 = vperm.xlu0 %1561, %v889
      %v1563 = vpop.permute.xlu0 %1562
      %1565 = vset.pattern.permute.xlu0 13
      %1566 = vperm.xlu0 %1565, %v890
      %v1567 = vpop.permute.xlu0 %1566
      %1569 = vset.pattern.permute.xlu0 13
      %1570 = vperm.xlu0 %1569, %v891
      %v1571 = vpop.permute.xlu0 %1570
      %1573 = vset.pattern.permute.xlu0 13
      %1574 = vperm.xlu0 %1573, %v892
      %v1575 = vpop.permute.xlu0 %1574
      %1577 = vset.pattern.permute.xlu0 13
      %1578 = vperm.xlu0 %1577, %v893
      %v1579 = vpop.permute.xlu0 %1578
      %1581 = vset.pattern.permute.xlu0 13
      %1582 = vperm.xlu0 %1581, %v894
      %v1583 = vpop.permute.xlu0 %1582
      %1585 = vset.pattern.permute.xlu0 13
      %1586 = vperm.xlu0 %1585, %v895
      %v1587 = vpop.permute.xlu0 %1586
      %1589 = vset.pattern.permute.xlu0 13
      %1590 = vperm.xlu0 %1589, %v896
      %v1591 = vpop.permute.xlu0 %1590
      %1593 = vset.pattern.permute.xlu0 13
      %1594 = vperm.xlu0 %1593, %v897
      %v1595 = vpop.permute.xlu0 %1594
      %1597 = vset.pattern.permute.xlu0 13
      %1598 = vperm.xlu0 %1597, %v898
      %v1599 = vpop.permute.xlu0 %1598
      %1601 = vset.pattern.permute.xlu0 13
      %1602 = vperm.xlu0 %1601, %v899
      %v1603 = vpop.permute.xlu0 %1602
      %1605 = vset.pattern.permute.xlu0 13
      %1606 = vperm.xlu0 %1605, %v900
      %v1607 = vpop.permute.xlu0 %1606
      %1609 = vset.pattern.permute.xlu0 13
      %1610 = vperm.xlu0 %1609, %v901
      %v1611 = vpop.permute.xlu0 %1610
      %1613 = vset.pattern.permute.xlu0 13
      %1614 = vperm.xlu0 %1613, %v902
      %v1615 = vpop.permute.xlu0 %1614
      %1617 = vset.pattern.permute.xlu0 13
      %1618 = vperm.xlu0 %1617, %v903
      %v1619 = vpop.permute.xlu0 %1618
      %1621 = vset.pattern.permute.xlu0 13
      %1622 = vperm.xlu0 %1621, %v904
      %v1623 = vpop.permute.xlu0 %1622
      %1625 = vset.pattern.permute.xlu0 13
      %1626 = vperm.xlu0 %1625, %v905
      %v1627 = vpop.permute.xlu0 %1626
      %1629 = vset.pattern.permute.xlu0 13
      %1630 = vperm.xlu0 %1629, %v906
      %v1631 = vpop.permute.xlu0 %1630
      %1633 = vset.pattern.permute.xlu0 13
      %1634 = vperm.xlu0 %1633, %v907
      %v1635 = vpop.permute.xlu0 %1634
      %1637 = vset.pattern.permute.xlu0 13
      %1638 = vperm.xlu0 %1637, %v908
      %v1639 = vpop.permute.xlu0 %1638
      %1641 = vset.pattern.permute.xlu0 13
      %1642 = vperm.xlu0 %1641, %v909
      %v1643 = vpop.permute.xlu0 %1642
      %1645 = vset.pattern.permute.xlu0 13
      %1646 = vperm.xlu0 %1645, %v910
      %v1647 = vpop.permute.xlu0 %1646
      %1649 = vset.pattern.permute.xlu0 13
      %1650 = vperm.xlu0 %1649, %v911
      %v1651 = vpop.permute.xlu0 %1650
      %1653 = vset.pattern.permute.xlu0 13
      %1654 = vperm.xlu0 %1653, %v912
      %v1655 = vpop.permute.xlu0 %1654
      %1657 = vset.pattern.permute.xlu0 13
      %1658 = vperm.xlu0 %1657, %v913
      %v1659 = vpop.permute.xlu0 %1658
      %1661 = vset.pattern.permute.xlu0 13
      %1662 = vperm.xlu0 %1661, %v914
      %v1663 = vpop.permute.xlu0 %1662
      %1665 = vset.pattern.permute.xlu0 13
      %1666 = vperm.xlu0 %1665, %v915
      %v1667 = vpop.permute.xlu0 %1666
      %1669 = vset.pattern.permute.xlu0 13
      %1670 = vperm.xlu0 %1669, %v916
      %v1671 = vpop.permute.xlu0 %1670
      %1673 = vset.pattern.permute.xlu0 13
      %1674 = vperm.xlu0 %1673, %v917
      %v1675 = vpop.permute.xlu0 %1674
      %1677 = vset.pattern.permute.xlu0 13
      %1678 = vperm.xlu0 %1677, %v918
      %v1679 = vpop.permute.xlu0 %1678
      %1681 = vset.pattern.permute.xlu0 13
      %1682 = vperm.xlu0 %1681, %v919
      %v1683 = vpop.permute.xlu0 %1682
      %1685 = vset.pattern.permute.xlu0 13
      %1686 = vperm.xlu0 %1685, %v920
      %v1687 = vpop.permute.xlu0 %1686
      %v1689 = vsel %vm12, %v1563, %v1529
      %v1690 = vsel %vm12, %v1567, %v1530
      %v1691 = vsel %vm12, %v1571, %v1531
      %v1692 = vsel %vm12, %v1575, %v1532
      %v1693 = vsel %vm12, %v1579, %v1533
      %v1694 = vsel %vm12, %v1583, %v1534
      %v1695 = vsel %vm12, %v1587, %v1535
      %v1696 = vsel %vm12, %v1591, %v1536
      %v1697 = vsel %vm12, %v1595, %v1537
      %v1698 = vsel %vm12, %v1599, %v1538
      %v1699 = vsel %vm12, %v1603, %v1539
      %v1700 = vsel %vm12, %v1607, %v1540
      %v1701 = vsel %vm12, %v1611, %v1541
      %v1702 = vsel %vm12, %v1615, %v1542
      %v1703 = vsel %vm12, %v1619, %v1543
      %v1704 = vsel %vm12, %v1623, %v1544
      %v1705 = vsel %vm12, %v1627, %v1545
      %v1706 = vsel %vm12, %v1631, %v1546
      %v1707 = vsel %vm12, %v1635, %v1547
      %v1708 = vsel %vm12, %v1639, %v1548
      %v1709 = vsel %vm12, %v1643, %v1549
      %v1710 = vsel %vm12, %v1647, %v1550
      %v1711 = vsel %vm12, %v1651, %v1551
      %v1712 = vsel %vm12, %v1655, %v1552
      %v1713 = vsel %vm12, %v1659, %v1553
      %v1714 = vsel %vm12, %v1663, %v1554
      %v1715 = vsel %vm12, %v1667, %v1555
      %v1716 = vsel %vm12, %v1671, %v1556
      %v1717 = vsel %vm12, %v1675, %v1557
      %v1718 = vsel %vm12, %v1679, %v1558
      %v1719 = vsel %vm12, %v1683, %v1559
      %v1720 = vsel %vm12, %v1687, %v1560
      %1721 = vset.pattern.permute.xlu0 12
      %1722 = vperm.xlu0 %1721, %v889
      %v1723 = vpop.permute.xlu0 %1722
      %1725 = vset.pattern.permute.xlu0 12
      %1726 = vperm.xlu0 %1725, %v890
      %v1727 = vpop.permute.xlu0 %1726
      %1729 = vset.pattern.permute.xlu0 12
      %1730 = vperm.xlu0 %1729, %v891
      %v1731 = vpop.permute.xlu0 %1730
      %1733 = vset.pattern.permute.xlu0 12
      %1734 = vperm.xlu0 %1733, %v892
      %v1735 = vpop.permute.xlu0 %1734
      %1737 = vset.pattern.permute.xlu0 12
      %1738 = vperm.xlu0 %1737, %v893
      %v1739 = vpop.permute.xlu0 %1738
      %1741 = vset.pattern.permute.xlu0 12
      %1742 = vperm.xlu0 %1741, %v894
      %v1743 = vpop.permute.xlu0 %1742
      %1745 = vset.pattern.permute.xlu0 12
      %1746 = vperm.xlu0 %1745, %v895
      %v1747 = vpop.permute.xlu0 %1746
      %1749 = vset.pattern.permute.xlu0 12
      %1750 = vperm.xlu0 %1749, %v896
      %v1751 = vpop.permute.xlu0 %1750
      %1753 = vset.pattern.permute.xlu0 12
      %1754 = vperm.xlu0 %1753, %v897
      %v1755 = vpop.permute.xlu0 %1754
      %1757 = vset.pattern.permute.xlu0 12
      %1758 = vperm.xlu0 %1757, %v898
      %v1759 = vpop.permute.xlu0 %1758
      %1761 = vset.pattern.permute.xlu0 12
      %1762 = vperm.xlu0 %1761, %v899
      %v1763 = vpop.permute.xlu0 %1762
      %1765 = vset.pattern.permute.xlu0 12
      %1766 = vperm.xlu0 %1765, %v900
      %v1767 = vpop.permute.xlu0 %1766
      %1769 = vset.pattern.permute.xlu0 12
      %1770 = vperm.xlu0 %1769, %v901
      %v1771 = vpop.permute.xlu0 %1770
      %1773 = vset.pattern.permute.xlu0 12
      %1774 = vperm.xlu0 %1773, %v902
      %v1775 = vpop.permute.xlu0 %1774
      %1777 = vset.pattern.permute.xlu0 12
      %1778 = vperm.xlu0 %1777, %v903
      %v1779 = vpop.permute.xlu0 %1778
      %1781 = vset.pattern.permute.xlu0 12
      %1782 = vperm.xlu0 %1781, %v904
      %v1783 = vpop.permute.xlu0 %1782
      %1785 = vset.pattern.permute.xlu0 12
      %1786 = vperm.xlu0 %1785, %v905
      %v1787 = vpop.permute.xlu0 %1786
      %1789 = vset.pattern.permute.xlu0 12
      %1790 = vperm.xlu0 %1789, %v906
      %v1791 = vpop.permute.xlu0 %1790
      %1793 = vset.pattern.permute.xlu0 12
      %1794 = vperm.xlu0 %1793, %v907
      %v1795 = vpop.permute.xlu0 %1794
      %1797 = vset.pattern.permute.xlu0 12
      %1798 = vperm.xlu0 %1797, %v908
      %v1799 = vpop.permute.xlu0 %1798
      %1801 = vset.pattern.permute.xlu0 12
      %1802 = vperm.xlu0 %1801, %v909
      %v1803 = vpop.permute.xlu0 %1802
      %1805 = vset.pattern.permute.xlu0 12
      %1806 = vperm.xlu0 %1805, %v910
      %v1807 = vpop.permute.xlu0 %1806
      %1809 = vset.pattern.permute.xlu0 12
      %1810 = vperm.xlu0 %1809, %v911
      %v1811 = vpop.permute.xlu0 %1810
      %1813 = vset.pattern.permute.xlu0 12
      %1814 = vperm.xlu0 %1813, %v912
      %v1815 = vpop.permute.xlu0 %1814
      %1817 = vset.pattern.permute.xlu0 12
      %1818 = vperm.xlu0 %1817, %v913
      %v1819 = vpop.permute.xlu0 %1818
      %1821 = vset.pattern.permute.xlu0 12
      %1822 = vperm.xlu0 %1821, %v914
      %v1823 = vpop.permute.xlu0 %1822
      %1825 = vset.pattern.permute.xlu0 12
      %1826 = vperm.xlu0 %1825, %v915
      %v1827 = vpop.permute.xlu0 %1826
      %1829 = vset.pattern.permute.xlu0 12
      %1830 = vperm.xlu0 %1829, %v916
      %v1831 = vpop.permute.xlu0 %1830
      %1833 = vset.pattern.permute.xlu0 12
      %1834 = vperm.xlu0 %1833, %v917
      %v1835 = vpop.permute.xlu0 %1834
      %1837 = vset.pattern.permute.xlu0 12
      %1838 = vperm.xlu0 %1837, %v918
      %v1839 = vpop.permute.xlu0 %1838
      %1841 = vset.pattern.permute.xlu0 12
      %1842 = vperm.xlu0 %1841, %v919
      %v1843 = vpop.permute.xlu0 %1842
      %1845 = vset.pattern.permute.xlu0 12
      %1846 = vperm.xlu0 %1845, %v920
      %v1847 = vpop.permute.xlu0 %1846
      %v1849 = vsel %vm11, %v1723, %v1689
      %v1850 = vsel %vm11, %v1727, %v1690
      %v1851 = vsel %vm11, %v1731, %v1691
      %v1852 = vsel %vm11, %v1735, %v1692
      %v1853 = vsel %vm11, %v1739, %v1693
      %v1854 = vsel %vm11, %v1743, %v1694
      %v1855 = vsel %vm11, %v1747, %v1695
      %v1856 = vsel %vm11, %v1751, %v1696
      %v1857 = vsel %vm11, %v1755, %v1697
      %v1858 = vsel %vm11, %v1759, %v1698
      %v1859 = vsel %vm11, %v1763, %v1699
      %v1860 = vsel %vm11, %v1767, %v1700
      %v1861 = vsel %vm11, %v1771, %v1701
      %v1862 = vsel %vm11, %v1775, %v1702
      %v1863 = vsel %vm11, %v1779, %v1703
      %v1864 = vsel %vm11, %v1783, %v1704
      %v1865 = vsel %vm11, %v1787, %v1705
      %v1866 = vsel %vm11, %v1791, %v1706
      %v1867 = vsel %vm11, %v1795, %v1707
      %v1868 = vsel %vm11, %v1799, %v1708
      %v1869 = vsel %vm11, %v1803, %v1709
      %v1870 = vsel %vm11, %v1807, %v1710
      %v1871 = vsel %vm11, %v1811, %v1711
      %v1872 = vsel %vm11, %v1815, %v1712
      %v1873 = vsel %vm11, %v1819, %v1713
      %v1874 = vsel %vm11, %v1823, %v1714
      %v1875 = vsel %vm11, %v1827, %v1715
      %v1876 = vsel %vm11, %v1831, %v1716
      %v1877 = vsel %vm11, %v1835, %v1717
      %v1878 = vsel %vm11, %v1839, %v1718
      %v1879 = vsel %vm11, %v1843, %v1719
      %v1880 = vsel %vm11, %v1847, %v1720
      %v1881 = vmul.f32 %v25, %v1849
      %v1882 = vmul.f32 %v26, %v1850
      %v1883 = vmul.f32 %v27, %v1851
      %v1884 = vmul.f32 %v28, %v1852
      %v1885 = vmul.f32 %v29, %v1853
      %v1886 = vmul.f32 %v30, %v1854
      %v1887 = vmul.f32 %v31, %v1855
      %v1888 = vmul.f32 %v32, %v1856
      %v1889 = vmul.f32 %v33, %v1857
      %v1890 = vmul.f32 %v34, %v1858
      %v1891 = vmul.f32 %v35, %v1859
      %v1892 = vmul.f32 %v36, %v1860
      %v1893 = vmul.f32 %v37, %v1861
      %v1894 = vmul.f32 %v38, %v1862
      %v1895 = vmul.f32 %v39, %v1863
      %v1896 = vmul.f32 %v40, %v1864
      %v1897 = vmul.f32 %v41, %v1865
      %v1898 = vmul.f32 %v42, %v1866
      %v1899 = vmul.f32 %v43, %v1867
      %v1900 = vmul.f32 %v44, %v1868
      %v1901 = vmul.f32 %v45, %v1869
      %v1902 = vmul.f32 %v46, %v1870
      %v1903 = vmul.f32 %v47, %v1871
      %v1904 = vmul.f32 %v48, %v1872
      %v1905 = vmul.f32 %v49, %v1873
      %v1906 = vmul.f32 %v50, %v1874
      %v1907 = vmul.f32 %v51, %v1875
      %v1908 = vmul.f32 %v52, %v1876
      %v1909 = vmul.f32 %v53, %v1877
      %v1910 = vmul.f32 %v54, %v1878
      %v1911 = vmul.f32 %v55, %v1879
      %v1912 = vmul.f32 %v56, %v1880
      %1945 = vrot.lane.b32.xlu0 %v1881, 122
      %v1946 = vpop.permute.xlu0 %1945
      %1947 = vrot.lane.b32.xlu0 %v1882, 122
      %v1948 = vpop.permute.xlu0 %1947
      %1949 = vrot.lane.b32.xlu0 %v1883, 122
      %v1950 = vpop.permute.xlu0 %1949
      %1951 = vrot.lane.b32.xlu0 %v1884, 122
      %v1952 = vpop.permute.xlu0 %1951
      %1953 = vrot.lane.b32.xlu0 %v1885, 122
      %v1954 = vpop.permute.xlu0 %1953
      %1955 = vrot.lane.b32.xlu0 %v1886, 122
      %v1956 = vpop.permute.xlu0 %1955
      %1957 = vrot.lane.b32.xlu0 %v1887, 122
      %v1958 = vpop.permute.xlu0 %1957
      %1959 = vrot.lane.b32.xlu0 %v1888, 122
      %v1960 = vpop.permute.xlu0 %1959
      %1961 = vrot.lane.b32.xlu0 %v1889, 122
      %v1962 = vpop.permute.xlu0 %1961
      %1963 = vrot.lane.b32.xlu0 %v1890, 122
      %v1964 = vpop.permute.xlu0 %1963
      %1965 = vrot.lane.b32.xlu0 %v1891, 122
      %v1966 = vpop.permute.xlu0 %1965
      %1967 = vrot.lane.b32.xlu0 %v1892, 122
      %v1968 = vpop.permute.xlu0 %1967
      %1969 = vrot.lane.b32.xlu0 %v1893, 122
      %v1970 = vpop.permute.xlu0 %1969
      %1971 = vrot.lane.b32.xlu0 %v1894, 122
      %v1972 = vpop.permute.xlu0 %1971
      %1973 = vrot.lane.b32.xlu0 %v1895, 122
      %v1974 = vpop.permute.xlu0 %1973
      %1975 = vrot.lane.b32.xlu0 %v1896, 122
      %v1976 = vpop.permute.xlu0 %1975
      %1977 = vrot.lane.b32.xlu0 %v1897, 122
      %v1978 = vpop.permute.xlu0 %1977
      %1979 = vrot.lane.b32.xlu0 %v1898, 122
      %v1980 = vpop.permute.xlu0 %1979
      %1981 = vrot.lane.b32.xlu0 %v1899, 122
      %v1982 = vpop.permute.xlu0 %1981
      %1983 = vrot.lane.b32.xlu0 %v1900, 122
      %v1984 = vpop.permute.xlu0 %1983
      %1985 = vrot.lane.b32.xlu0 %v1901, 122
      %v1986 = vpop.permute.xlu0 %1985
      %1987 = vrot.lane.b32.xlu0 %v1902, 122
      %v1988 = vpop.permute.xlu0 %1987
      %1989 = vrot.lane.b32.xlu0 %v1903, 122
      %v1990 = vpop.permute.xlu0 %1989
      %1991 = vrot.lane.b32.xlu0 %v1904, 122
      %v1992 = vpop.permute.xlu0 %1991
      %1993 = vrot.lane.b32.xlu0 %v1905, 122
      %v1994 = vpop.permute.xlu0 %1993
      %1995 = vrot.lane.b32.xlu0 %v1906, 122
      %v1996 = vpop.permute.xlu0 %1995
      %1997 = vrot.lane.b32.xlu0 %v1907, 122
      %v1998 = vpop.permute.xlu0 %1997
      %1999 = vrot.lane.b32.xlu0 %v1908, 122
      %v2000 = vpop.permute.xlu0 %1999
      %2001 = vrot.lane.b32.xlu0 %v1909, 122
      %v2002 = vpop.permute.xlu0 %2001
      %2003 = vrot.lane.b32.xlu0 %v1910, 122
      %v2004 = vpop.permute.xlu0 %2003
      %2005 = vrot.lane.b32.xlu0 %v1911, 122
      %v2006 = vpop.permute.xlu0 %2005
      %2007 = vrot.lane.b32.xlu0 %v1912, 122
      %v2008 = vpop.permute.xlu0 %2007
      %v2041 = vsel %vm16, %v249, %v1946
      %v2042 = vsel %vm16, %v250, %v1948
      %v2043 = vsel %vm16, %v251, %v1950
      %v2044 = vsel %vm16, %v252, %v1952
      %v2045 = vsel %vm16, %v253, %v1954
      %v2046 = vsel %vm16, %v254, %v1956
      %v2047 = vsel %vm16, %v255, %v1958
      %v2048 = vsel %vm16, %v256, %v1960
      %v2049 = vsel %vm16, %v257, %v1962
      %v2050 = vsel %vm16, %v258, %v1964
      %v2051 = vsel %vm16, %v259, %v1966
      %v2052 = vsel %vm16, %v260, %v1968
      %v2053 = vsel %vm16, %v261, %v1970
      %v2054 = vsel %vm16, %v262, %v1972
      %v2055 = vsel %vm16, %v263, %v1974
      %v2056 = vsel %vm16, %v264, %v1976
      %v2057 = vsel %vm16, %v265, %v1978
      %v2058 = vsel %vm16, %v266, %v1980
      %v2059 = vsel %vm16, %v267, %v1982
      %v2060 = vsel %vm16, %v268, %v1984
      %v2061 = vsel %vm16, %v269, %v1986
      %v2062 = vsel %vm16, %v270, %v1988
      %v2063 = vsel %vm16, %v271, %v1990
      %v2064 = vsel %vm16, %v272, %v1992
      %v2065 = vsel %vm16, %v273, %v1994
      %v2066 = vsel %vm16, %v274, %v1996
      %v2067 = vsel %vm16, %v275, %v1998
      %v2068 = vsel %vm16, %v276, %v2000
      %v2069 = vsel %vm16, %v277, %v2002
      %v2070 = vsel %vm16, %v278, %v2004
      %v2071 = vsel %vm16, %v279, %v2006
      %v2072 = vsel %vm16, %v280, %v2008
      %s2073 = scalar_lea.vmem [#allocation2], %s23
      %vm2074 = vcmask 277504
      %2075 = vst.msk [vmem:[%s2073] sm:$0xff] %vm2074, %v2041
      %2076 = vst.msk [vmem:[%s2073 + $0x8] sm:$0xff] %vm2074, %v2042
      %2077 = vst.msk [vmem:[%s2073 + $0x10] sm:$0xff] %vm2074, %v2043
      %2078 = vst.msk [vmem:[%s2073 + $0x18] sm:$0xff] %vm2074, %v2044
      %2079 = vst.msk [vmem:[%s2073 + $0x20] sm:$0xff] %vm2074, %v2045
      %2080 = vst.msk [vmem:[%s2073 + $0x28] sm:$0xff] %vm2074, %v2046
      %2081 = vst.msk [vmem:[%s2073 + $0x30] sm:$0xff] %vm2074, %v2047
      %2082 = vst.msk [vmem:[%s2073 + $0x38] sm:$0xff] %vm2074, %v2048
      %2083 = vst.msk [vmem:[%s2073 + $0x40] sm:$0xff] %vm2074, %v2049
      %2084 = vst.msk [vmem:[%s2073 + $0x48] sm:$0xff] %vm2074, %v2050
      %2085 = vst.msk [vmem:[%s2073 + $0x50] sm:$0xff] %vm2074, %v2051
      %2086 = vst.msk [vmem:[%s2073 + $0x58] sm:$0xff] %vm2074, %v2052
      %2087 = vst.msk [vmem:[%s2073 + $0x60] sm:$0xff] %vm2074, %v2053
      %2088 = vst.msk [vmem:[%s2073 + $0x68] sm:$0xff] %vm2074, %v2054
      %2089 = vst.msk [vmem:[%s2073 + $0x70] sm:$0xff] %vm2074, %v2055
      %2090 = vst.msk [vmem:[%s2073 + $0x78] sm:$0xff] %vm2074, %v2056
      %2091 = vst.msk [vmem:[%s2073 + $0x80] sm:$0xff] %vm2074, %v2057
      %2092 = vst.msk [vmem:[%s2073 + $0x88] sm:$0xff] %vm2074, %v2058
      %2093 = vst.msk [vmem:[%s2073 + $0x90] sm:$0xff] %vm2074, %v2059
      %2094 = vst.msk [vmem:[%s2073 + $0x98] sm:$0xff] %vm2074, %v2060
      %2095 = vst.msk [vmem:[%s2073 + $0xa0] sm:$0xff] %vm2074, %v2061
      %2096 = vst.msk [vmem:[%s2073 + $0xa8] sm:$0xff] %vm2074, %v2062
      %2097 = vst.msk [vmem:[%s2073 + $0xb0] sm:$0xff] %vm2074, %v2063
      %2098 = vst.msk [vmem:[%s2073 + $0xb8] sm:$0xff] %vm2074, %v2064
      %2099 = vst.msk [vmem:[%s2073 + $0xc0] sm:$0xff] %vm2074, %v2065
      %2100 = vst.msk [vmem:[%s2073 + $0xc8] sm:$0xff] %vm2074, %v2066
      %2101 = vst.msk [vmem:[%s2073 + $0xd0] sm:$0xff] %vm2074, %v2067
      %2102 = vst.msk [vmem:[%s2073 + $0xd8] sm:$0xff] %vm2074, %v2068
      %2103 = vst.msk [vmem:[%s2073 + $0xe0] sm:$0xff] %vm2074, %v2069
      %2104 = vst.msk [vmem:[%s2073 + $0xe8] sm:$0xff] %vm2074, %v2070
      %2105 = vst.msk [vmem:[%s2073 + $0xf0] sm:$0xff] %vm2074, %v2071
      %2106 = vst.msk [vmem:[%s2073 + $0xf8] sm:$0xff] %vm2074, %v2072
    $region10: #{tpu_custom_call.1} parent=1 // loop_footer
      %s22 = sadd.s32 1, %s18
    $region11: #{tpu_custom_call.1} parent=1 // loop_footer_branch
      %17 = sbr.rel target = $region7
    $region12: #{tpu_custom_call.1} parent=1 // loop_exit
      _
    // Predicated region
    $region13: #{tpu_custom_call.1} parent=1 // pred_check
      _
    $region14: #{tpu_custom_call.1} parent=1 // pred_check_branch
      %2108 = sbr.rel (0) target = $region16
    $region15: #{tpu_custom_call.1} parent=1 // pred_region
      // Predicated region
      $region17: #{tpu_custom_call.1} parent=15 // pred_check
        _
      $region18: #{tpu_custom_call.1} parent=15 // pred_check_branch
        %2110 = sbr.rel (0) target = $region20
      $region19: #{tpu_custom_call.1} parent=15 // pred_region
        // Predicated region
        $region21: #{tpu_custom_call.1} parent=19 // pred_check
          _
        $region22: #{tpu_custom_call.1} parent=19 // pred_check_branch
          %2112 = sbr.rel (0) target = $region24
        $region23: #{tpu_custom_call.1} parent=19 // pred_region
          // Predicated region
          $region36: #{tpu_custom_call.1} parent=23 // pred_check
            _
          $region37: #{tpu_custom_call.1} parent=23 // pred_check_branch
            %2376 = sbr.rel (0) target = $region39
          $region38: #{tpu_custom_call.1} parent=23 // pred_region
            loop: start=0, step=1, limit=1
            $region40: #{tpu_custom_call.1} parent=38 // loop_pre_header
              _
            $region41: #{tpu_custom_call.1} parent=38 // loop_header
              %s2378 = sphi 0, %s2382
              %p2379 = scmp.ge.s32.totalorder %s2378, 1
              %s2383 = sphi [#allocation2], [#allocation2]
              %s2384 = sphi %s1, %s1
            $region42: #{tpu_custom_call.1} parent=38 // loop_header_branch
              %2381 = sbr.rel (%p2379) target = $region46
            $region43: #{tpu_custom_call.1} parent=38 // loop_body
              %v2385 = vld [vmem:[%s2383] sm:$0xff]
              %2386 = vst [vmem:[%s2384] sm:$0xff] %v2385
              %v2387 = vld [vmem:[%s2383 + $0x8] sm:$0xff]
              %2388 = vst [vmem:[%s2384 + $0x8] sm:$0xff] %v2387
              %v2389 = vld [vmem:[%s2383 + $0x10] sm:$0xff]
              %2390 = vst [vmem:[%s2384 + $0x10] sm:$0xff] %v2389
              %v2391 = vld [vmem:[%s2383 + $0x18] sm:$0xff]
              %2392 = vst [vmem:[%s2384 + $0x18] sm:$0xff] %v2391
              %v2393 = vld [vmem:[%s2383 + $0x20] sm:$0xff]
              %2394 = vst [vmem:[%s2384 + $0x20] sm:$0xff] %v2393
              %v2395 = vld [vmem:[%s2383 + $0x28] sm:$0xff]
              %2396 = vst [vmem:[%s2384 + $0x28] sm:$0xff] %v2395
              %v2397 = vld [vmem:[%s2383 + $0x30] sm:$0xff]
              %2398 = vst [vmem:[%s2384 + $0x30] sm:$0xff] %v2397
              %v2399 = vld [vmem:[%s2383 + $0x38] sm:$0xff]
              %2400 = vst [vmem:[%s2384 + $0x38] sm:$0xff] %v2399
              %v2401 = vld [vmem:[%s2383 + $0x40] sm:$0xff]
              %2402 = vst [vmem:[%s2384 + $0x40] sm:$0xff] %v2401
              %v2403 = vld [vmem:[%s2383 + $0x48] sm:$0xff]
              %2404 = vst [vmem:[%s2384 + $0x48] sm:$0xff] %v2403
              %v2405 = vld [vmem:[%s2383 + $0x50] sm:$0xff]
              %2406 = vst [vmem:[%s2384 + $0x50] sm:$0xff] %v2405
              %v2407 = vld [vmem:[%s2383 + $0x58] sm:$0xff]
              %2408 = vst [vmem:[%s2384 + $0x58] sm:$0xff] %v2407
              %v2409 = vld [vmem:[%s2383 + $0x60] sm:$0xff]
              %2410 = vst [vmem:[%s2384 + $0x60] sm:$0xff] %v2409
              %v2411 = vld [vmem:[%s2383 + $0x68] sm:$0xff]
              %2412 = vst [vmem:[%s2384 + $0x68] sm:$0xff] %v2411
              %v2413 = vld [vmem:[%s2383 + $0x70] sm:$0xff]
              %2414 = vst [vmem:[%s2384 + $0x70] sm:$0xff] %v2413
              %v2415 = vld [vmem:[%s2383 + $0x78] sm:$0xff]
              %2416 = vst [vmem:[%s2384 + $0x78] sm:$0xff] %v2415
              %v2417 = vld [vmem:[%s2383 + $0x80] sm:$0xff]
              %2418 = vst [vmem:[%s2384 + $0x80] sm:$0xff] %v2417
              %v2419 = vld [vmem:[%s2383 + $0x88] sm:$0xff]
              %2420 = vst [vmem:[%s2384 + $0x88] sm:$0xff] %v2419
              %v2421 = vld [vmem:[%s2383 + $0x90] sm:$0xff]
              %2422 = vst [vmem:[%s2384 + $0x90] sm:$0xff] %v2421
              %v2423 = vld [vmem:[%s2383 + $0x98] sm:$0xff]
              %2424 = vst [vmem:[%s2384 + $0x98] sm:$0xff] %v2423
              %v2425 = vld [vmem:[%s2383 + $0xa0] sm:$0xff]
              %2426 = vst [vmem:[%s2384 + $0xa0] sm:$0xff] %v2425
              %v2427 = vld [vmem:[%s2383 + $0xa8] sm:$0xff]
              %2428 = vst [vmem:[%s2384 + $0xa8] sm:$0xff] %v2427
              %v2429 = vld [vmem:[%s2383 + $0xb0] sm:$0xff]
              %2430 = vst [vmem:[%s2384 + $0xb0] sm:$0xff] %v2429
              %v2431 = vld [vmem:[%s2383 + $0xb8] sm:$0xff]
              %2432 = vst [vmem:[%s2384 + $0xb8] sm:$0xff] %v2431
              %v2433 = vld [vmem:[%s2383 + $0xc0] sm:$0xff]
              %2434 = vst [vmem:[%s2384 + $0xc0] sm:$0xff] %v2433
              %v2435 = vld [vmem:[%s2383 + $0xc8] sm:$0xff]
              %2436 = vst [vmem:[%s2384 + $0xc8] sm:$0xff] %v2435
              %v2437 = vld [vmem:[%s2383 + $0xd0] sm:$0xff]
              %2438 = vst [vmem:[%s2384 + $0xd0] sm:$0xff] %v2437
              %v2439 = vld [vmem:[%s2383 + $0xd8] sm:$0xff]
              %2440 = vst [vmem:[%s2384 + $0xd8] sm:$0xff] %v2439
              %v2441 = vld [vmem:[%s2383 + $0xe0] sm:$0xff]
              %2442 = vst [vmem:[%s2384 + $0xe0] sm:$0xff] %v2441
              %v2443 = vld [vmem:[%s2383 + $0xe8] sm:$0xff]
              %2444 = vst [vmem:[%s2384 + $0xe8] sm:$0xff] %v2443
              %v2445 = vld [vmem:[%s2383 + $0xf0] sm:$0xff]
              %2446 = vst [vmem:[%s2384 + $0xf0] sm:$0xff] %v2445
              %v2447 = vld [vmem:[%s2383 + $0xf8] sm:$0xff]
              %2448 = vst [vmem:[%s2384 + $0xf8] sm:$0xff] %v2447
              %v2449 = vld [vmem:[%s2383 + $0x100] sm:$0xff]
              %2450 = vst [vmem:[%s2384 + $0x100] sm:$0xff] %v2449
              %v2451 = vld [vmem:[%s2383 + $0x108] sm:$0xff]
              %2452 = vst [vmem:[%s2384 + $0x108] sm:$0xff] %v2451
              %v2453 = vld [vmem:[%s2383 + $0x110] sm:$0xff]
              %2454 = vst [vmem:[%s2384 + $0x110] sm:$0xff] %v2453
              %v2455 = vld [vmem:[%s2383 + $0x118] sm:$0xff]
              %2456 = vst [vmem:[%s2384 + $0x118] sm:$0xff] %v2455
              %v2457 = vld [vmem:[%s2383 + $0x120] sm:$0xff]
              %2458 = vst [vmem:[%s2384 + $0x120] sm:$0xff] %v2457
              %v2459 = vld [vmem:[%s2383 + $0x128] sm:$0xff]
              %2460 = vst [vmem:[%s2384 + $0x128] sm:$0xff] %v2459
              %v2461 = vld [vmem:[%s2383 + $0x130] sm:$0xff]
              %2462 = vst [vmem:[%s2384 + $0x130] sm:$0xff] %v2461
              %v2463 = vld [vmem:[%s2383 + $0x138] sm:$0xff]
              %2464 = vst [vmem:[%s2384 + $0x138] sm:$0xff] %v2463
              %v2465 = vld [vmem:[%s2383 + $0x140] sm:$0xff]
              %2466 = vst [vmem:[%s2384 + $0x140] sm:$0xff] %v2465
              %v2467 = vld [vmem:[%s2383 + $0x148] sm:$0xff]
              %2468 = vst [vmem:[%s2384 + $0x148] sm:$0xff] %v2467
              %v2469 = vld [vmem:[%s2383 + $0x150] sm:$0xff]
              %2470 = vst [vmem:[%s2384 + $0x150] sm:$0xff] %v2469
              %v2471 = vld [vmem:[%s2383 + $0x158] sm:$0xff]
              %2472 = vst [vmem:[%s2384 + $0x158] sm:$0xff] %v2471
              %v2473 = vld [vmem:[%s2383 + $0x160] sm:$0xff]
              %2474 = vst [vmem:[%s2384 + $0x160] sm:$0xff] %v2473
              %v2475 = vld [vmem:[%s2383 + $0x168] sm:$0xff]
              %2476 = vst [vmem:[%s2384 + $0x168] sm:$0xff] %v2475
              %v2477 = vld [vmem:[%s2383 + $0x170] sm:$0xff]
              %2478 = vst [vmem:[%s2384 + $0x170] sm:$0xff] %v2477
              %v2479 = vld [vmem:[%s2383 + $0x178] sm:$0xff]
              %2480 = vst [vmem:[%s2384 + $0x178] sm:$0xff] %v2479
              %v2481 = vld [vmem:[%s2383 + $0x180] sm:$0xff]
              %2482 = vst [vmem:[%s2384 + $0x180] sm:$0xff] %v2481
              %v2483 = vld [vmem:[%s2383 + $0x188] sm:$0xff]
              %2484 = vst [vmem:[%s2384 + $0x188] sm:$0xff] %v2483
              %v2485 = vld [vmem:[%s2383 + $0x190] sm:$0xff]
              %2486 = vst [vmem:[%s2384 + $0x190] sm:$0xff] %v2485
              %v2487 = vld [vmem:[%s2383 + $0x198] sm:$0xff]
              %2488 = vst [vmem:[%s2384 + $0x198] sm:$0xff] %v2487
              %v2489 = vld [vmem:[%s2383 + $0x1a0] sm:$0xff]
              %2490 = vst [vmem:[%s2384 + $0x1a0] sm:$0xff] %v2489
              %v2491 = vld [vmem:[%s2383 + $0x1a8] sm:$0xff]
              %2492 = vst [vmem:[%s2384 + $0x1a8] sm:$0xff] %v2491
              %v2493 = vld [vmem:[%s2383 + $0x1b0] sm:$0xff]
              %2494 = vst [vmem:[%s2384 + $0x1b0] sm:$0xff] %v2493
              %v2495 = vld [vmem:[%s2383 + $0x1b8] sm:$0xff]
              %2496 = vst [vmem:[%s2384 + $0x1b8] sm:$0xff] %v2495
              %v2497 = vld [vmem:[%s2383 + $0x1c0] sm:$0xff]
              %2498 = vst [vmem:[%s2384 + $0x1c0] sm:$0xff] %v2497
              %v2499 = vld [vmem:[%s2383 + $0x1c8] sm:$0xff]
              %2500 = vst [vmem:[%s2384 + $0x1c8] sm:$0xff] %v2499
              %v2501 = vld [vmem:[%s2383 + $0x1d0] sm:$0xff]
              %2502 = vst [vmem:[%s2384 + $0x1d0] sm:$0xff] %v2501
              %v2503 = vld [vmem:[%s2383 + $0x1d8] sm:$0xff]
              %2504 = vst [vmem:[%s2384 + $0x1d8] sm:$0xff] %v2503
              %v2505 = vld [vmem:[%s2383 + $0x1e0] sm:$0xff]
              %2506 = vst [vmem:[%s2384 + $0x1e0] sm:$0xff] %v2505
              %v2507 = vld [vmem:[%s2383 + $0x1e8] sm:$0xff]
              %2508 = vst [vmem:[%s2384 + $0x1e8] sm:$0xff] %v2507
              %v2509 = vld [vmem:[%s2383 + $0x1f0] sm:$0xff]
              %2510 = vst [vmem:[%s2384 + $0x1f0] sm:$0xff] %v2509
              %v2511 = vld [vmem:[%s2383 + $0x1f8] sm:$0xff]
              %2512 = vst [vmem:[%s2384 + $0x1f8] sm:$0xff] %v2511
              %v2513 = vld [vmem:[%s2383 + $0x200] sm:$0xff]
              %2514 = vst [vmem:[%s2384 + $0x200] sm:$0xff] %v2513
              %v2515 = vld [vmem:[%s2383 + $0x208] sm:$0xff]
              %2516 = vst [vmem:[%s2384 + $0x208] sm:$0xff] %v2515
              %v2517 = vld [vmem:[%s2383 + $0x210] sm:$0xff]
              %2518 = vst [vmem:[%s2384 + $0x210] sm:$0xff] %v2517
              %v2519 = vld [vmem:[%s2383 + $0x218] sm:$0xff]
              %2520 = vst [vmem:[%s2384 + $0x218] sm:$0xff] %v2519
              %v2521 = vld [vmem:[%s2383 + $0x220] sm:$0xff]
              %2522 = vst [vmem:[%s2384 + $0x220] sm:$0xff] %v2521
              %v2523 = vld [vmem:[%s2383 + $0x228] sm:$0xff]
              %2524 = vst [vmem:[%s2384 + $0x228] sm:$0xff] %v2523
              %v2525 = vld [vmem:[%s2383 + $0x230] sm:$0xff]
              %2526 = vst [vmem:[%s2384 + $0x230] sm:$0xff] %v2525
              %v2527 = vld [vmem:[%s2383 + $0x238] sm:$0xff]
              %2528 = vst [vmem:[%s2384 + $0x238] sm:$0xff] %v2527
              %v2529 = vld [vmem:[%s2383 + $0x240] sm:$0xff]
              %2530 = vst [vmem:[%s2384 + $0x240] sm:$0xff] %v2529
              %v2531 = vld [vmem:[%s2383 + $0x248] sm:$0xff]
              %2532 = vst [vmem:[%s2384 + $0x248] sm:$0xff] %v2531
              %v2533 = vld [vmem:[%s2383 + $0x250] sm:$0xff]
              %2534 = vst [vmem:[%s2384 + $0x250] sm:$0xff] %v2533
              %v2535 = vld [vmem:[%s2383 + $0x258] sm:$0xff]
              %2536 = vst [vmem:[%s2384 + $0x258] sm:$0xff] %v2535
              %v2537 = vld [vmem:[%s2383 + $0x260] sm:$0xff]
              %2538 = vst [vmem:[%s2384 + $0x260] sm:$0xff] %v2537
              %v2539 = vld [vmem:[%s2383 + $0x268] sm:$0xff]
              %2540 = vst [vmem:[%s2384 + $0x268] sm:$0xff] %v2539
              %v2541 = vld [vmem:[%s2383 + $0x270] sm:$0xff]
              %2542 = vst [vmem:[%s2384 + $0x270] sm:$0xff] %v2541
              %v2543 = vld [vmem:[%s2383 + $0x278] sm:$0xff]
              %2544 = vst [vmem:[%s2384 + $0x278] sm:$0xff] %v2543
              %v2545 = vld [vmem:[%s2383 + $0x280] sm:$0xff]
              %2546 = vst [vmem:[%s2384 + $0x280] sm:$0xff] %v2545
              %v2547 = vld [vmem:[%s2383 + $0x288] sm:$0xff]
              %2548 = vst [vmem:[%s2384 + $0x288] sm:$0xff] %v2547
              %v2549 = vld [vmem:[%s2383 + $0x290] sm:$0xff]
              %2550 = vst [vmem:[%s2384 + $0x290] sm:$0xff] %v2549
              %v2551 = vld [vmem:[%s2383 + $0x298] sm:$0xff]
              %2552 = vst [vmem:[%s2384 + $0x298] sm:$0xff] %v2551
              %v2553 = vld [vmem:[%s2383 + $0x2a0] sm:$0xff]
              %2554 = vst [vmem:[%s2384 + $0x2a0] sm:$0xff] %v2553
              %v2555 = vld [vmem:[%s2383 + $0x2a8] sm:$0xff]
              %2556 = vst [vmem:[%s2384 + $0x2a8] sm:$0xff] %v2555
              %v2557 = vld [vmem:[%s2383 + $0x2b0] sm:$0xff]
              %2558 = vst [vmem:[%s2384 + $0x2b0] sm:$0xff] %v2557
              %v2559 = vld [vmem:[%s2383 + $0x2b8] sm:$0xff]
              %2560 = vst [vmem:[%s2384 + $0x2b8] sm:$0xff] %v2559
              %v2561 = vld [vmem:[%s2383 + $0x2c0] sm:$0xff]
              %2562 = vst [vmem:[%s2384 + $0x2c0] sm:$0xff] %v2561
              %v2563 = vld [vmem:[%s2383 + $0x2c8] sm:$0xff]
              %2564 = vst [vmem:[%s2384 + $0x2c8] sm:$0xff] %v2563
              %v2565 = vld [vmem:[%s2383 + $0x2d0] sm:$0xff]
              %2566 = vst [vmem:[%s2384 + $0x2d0] sm:$0xff] %v2565
              %v2567 = vld [vmem:[%s2383 + $0x2d8] sm:$0xff]
              %2568 = vst [vmem:[%s2384 + $0x2d8] sm:$0xff] %v2567
              %v2569 = vld [vmem:[%s2383 + $0x2e0] sm:$0xff]
              %2570 = vst [vmem:[%s2384 + $0x2e0] sm:$0xff] %v2569
              %v2571 = vld [vmem:[%s2383 + $0x2e8] sm:$0xff]
              %2572 = vst [vmem:[%s2384 + $0x2e8] sm:$0xff] %v2571
              %v2573 = vld [vmem:[%s2383 + $0x2f0] sm:$0xff]
              %2574 = vst [vmem:[%s2384 + $0x2f0] sm:$0xff] %v2573
              %v2575 = vld [vmem:[%s2383 + $0x2f8] sm:$0xff]
              %2576 = vst [vmem:[%s2384 + $0x2f8] sm:$0xff] %v2575
              %v2577 = vld [vmem:[%s2383 + $0x300] sm:$0xff]
              %2578 = vst [vmem:[%s2384 + $0x300] sm:$0xff] %v2577
              %v2579 = vld [vmem:[%s2383 + $0x308] sm:$0xff]
              %2580 = vst [vmem:[%s2384 + $0x308] sm:$0xff] %v2579
              %v2581 = vld [vmem:[%s2383 + $0x310] sm:$0xff]
              %2582 = vst [vmem:[%s2384 + $0x310] sm:$0xff] %v2581
              %v2583 = vld [vmem:[%s2383 + $0x318] sm:$0xff]
              %2584 = vst [vmem:[%s2384 + $0x318] sm:$0xff] %v2583
              %v2585 = vld [vmem:[%s2383 + $0x320] sm:$0xff]
              %2586 = vst [vmem:[%s2384 + $0x320] sm:$0xff] %v2585
              %v2587 = vld [vmem:[%s2383 + $0x328] sm:$0xff]
              %2588 = vst [vmem:[%s2384 + $0x328] sm:$0xff] %v2587
              %v2589 = vld [vmem:[%s2383 + $0x330] sm:$0xff]
              %2590 = vst [vmem:[%s2384 + $0x330] sm:$0xff] %v2589
              %v2591 = vld [vmem:[%s2383 + $0x338] sm:$0xff]
              %2592 = vst [vmem:[%s2384 + $0x338] sm:$0xff] %v2591
              %v2593 = vld [vmem:[%s2383 + $0x340] sm:$0xff]
              %2594 = vst [vmem:[%s2384 + $0x340] sm:$0xff] %v2593
              %v2595 = vld [vmem:[%s2383 + $0x348] sm:$0xff]
              %2596 = vst [vmem:[%s2384 + $0x348] sm:$0xff] %v2595
              %v2597 = vld [vmem:[%s2383 + $0x350] sm:$0xff]
              %2598 = vst [vmem:[%s2384 + $0x350] sm:$0xff] %v2597
              %v2599 = vld [vmem:[%s2383 + $0x358] sm:$0xff]
              %2600 = vst [vmem:[%s2384 + $0x358] sm:$0xff] %v2599
              %v2601 = vld [vmem:[%s2383 + $0x360] sm:$0xff]
              %2602 = vst [vmem:[%s2384 + $0x360] sm:$0xff] %v2601
              %v2603 = vld [vmem:[%s2383 + $0x368] sm:$0xff]
              %2604 = vst [vmem:[%s2384 + $0x368] sm:$0xff] %v2603
              %v2605 = vld [vmem:[%s2383 + $0x370] sm:$0xff]
              %2606 = vst [vmem:[%s2384 + $0x370] sm:$0xff] %v2605
              %v2607 = vld [vmem:[%s2383 + $0x378] sm:$0xff]
              %2608 = vst [vmem:[%s2384 + $0x378] sm:$0xff] %v2607
              %v2609 = vld [vmem:[%s2383 + $0x380] sm:$0xff]
              %2610 = vst [vmem:[%s2384 + $0x380] sm:$0xff] %v2609
              %v2611 = vld [vmem:[%s2383 + $0x388] sm:$0xff]
              %2612 = vst [vmem:[%s2384 + $0x388] sm:$0xff] %v2611
              %v2613 = vld [vmem:[%s2383 + $0x390] sm:$0xff]
              %2614 = vst [vmem:[%s2384 + $0x390] sm:$0xff] %v2613
              %v2615 = vld [vmem:[%s2383 + $0x398] sm:$0xff]
              %2616 = vst [vmem:[%s2384 + $0x398] sm:$0xff] %v2615
              %v2617 = vld [vmem:[%s2383 + $0x3a0] sm:$0xff]
              %2618 = vst [vmem:[%s2384 + $0x3a0] sm:$0xff] %v2617
              %v2619 = vld [vmem:[%s2383 + $0x3a8] sm:$0xff]
              %2620 = vst [vmem:[%s2384 + $0x3a8] sm:$0xff] %v2619
              %v2621 = vld [vmem:[%s2383 + $0x3b0] sm:$0xff]
              %2622 = vst [vmem:[%s2384 + $0x3b0] sm:$0xff] %v2621
              %v2623 = vld [vmem:[%s2383 + $0x3b8] sm:$0xff]
              %2624 = vst [vmem:[%s2384 + $0x3b8] sm:$0xff] %v2623
              %v2625 = vld [vmem:[%s2383 + $0x3c0] sm:$0xff]
              %2626 = vst [vmem:[%s2384 + $0x3c0] sm:$0xff] %v2625
              %v2627 = vld [vmem:[%s2383 + $0x3c8] sm:$0xff]
              %2628 = vst [vmem:[%s2384 + $0x3c8] sm:$0xff] %v2627
              %v2629 = vld [vmem:[%s2383 + $0x3d0] sm:$0xff]
              %2630 = vst [vmem:[%s2384 + $0x3d0] sm:$0xff] %v2629
              %v2631 = vld [vmem:[%s2383 + $0x3d8] sm:$0xff]
              %2632 = vst [vmem:[%s2384 + $0x3d8] sm:$0xff] %v2631
              %v2633 = vld [vmem:[%s2383 + $0x3e0] sm:$0xff]
              %2634 = vst [vmem:[%s2384 + $0x3e0] sm:$0xff] %v2633
            $region44: #{tpu_custom_call.1} parent=38 // loop_footer
              %s2382 = sadd.s32 1, %s2378
            $region45: #{tpu_custom_call.1} parent=38 // loop_footer_branch
              %2377 = sbr.rel target = $region41
            $region46: #{tpu_custom_call.1} parent=38 // loop_exit
              _
          $region39: #{tpu_custom_call.1} parent=23 // pred_fallthru
            _
          // Predicated region
          $region47: #{tpu_custom_call.1} parent=23 // pred_check
            _
          $region48: #{tpu_custom_call.1} parent=23 // pred_check_branch
            %2636 = sbr.rel target = $region50
          $region49: #{tpu_custom_call.1} parent=23 // pred_region
            _
          $region50: #{tpu_custom_call.1} parent=23 // pred_fallthru
            _
        $region24: #{tpu_custom_call.1} parent=19 // pred_fallthru
          _
        // Predicated region
        $region25: #{tpu_custom_call.1} parent=19 // pred_check
          _
        $region26: #{tpu_custom_call.1} parent=19 // pred_check_branch
          %2114 = sbr.rel target = $region28
        $region27: #{tpu_custom_call.1} parent=19 // pred_region
          %s2116 = ssub.s32 256, 1
          loop: start=0, step=1, limit=1
          $region29: #{tpu_custom_call.1} parent=27 // loop_pre_header
            _
          $region30: #{tpu_custom_call.1} parent=27 // loop_header
            %s2118 = sphi 0, %s2122
            %p2119 = scmp.ge.s32.totalorder %s2118, 1
            %s2123 = sphi [#allocation2], [#allocation2]
            %s2124 = sphi %s1, %s1
          $region31: #{tpu_custom_call.1} parent=27 // loop_header_branch
            %2121 = sbr.rel (%p2119) target = $region35
          $region32: #{tpu_custom_call.1} parent=27 // loop_body
            %v2125 = vld [vmem:[%s2123] sm:%s2116]
            %2126 = vst [vmem:[%s2124] sm:%s2116] %v2125
            %v2127 = vld [vmem:[%s2123 + $0x8] sm:%s2116]
            %2128 = vst [vmem:[%s2124 + $0x8] sm:%s2116] %v2127
            %v2129 = vld [vmem:[%s2123 + $0x10] sm:%s2116]
            %2130 = vst [vmem:[%s2124 + $0x10] sm:%s2116] %v2129
            %v2131 = vld [vmem:[%s2123 + $0x18] sm:%s2116]
            %2132 = vst [vmem:[%s2124 + $0x18] sm:%s2116] %v2131
            %v2133 = vld [vmem:[%s2123 + $0x20] sm:%s2116]
            %2134 = vst [vmem:[%s2124 + $0x20] sm:%s2116] %v2133
            %v2135 = vld [vmem:[%s2123 + $0x28] sm:%s2116]
            %2136 = vst [vmem:[%s2124 + $0x28] sm:%s2116] %v2135
            %v2137 = vld [vmem:[%s2123 + $0x30] sm:%s2116]
            %2138 = vst [vmem:[%s2124 + $0x30] sm:%s2116] %v2137
            %v2139 = vld [vmem:[%s2123 + $0x38] sm:%s2116]
            %2140 = vst [vmem:[%s2124 + $0x38] sm:%s2116] %v2139
            %v2141 = vld [vmem:[%s2123 + $0x40] sm:%s2116]
            %2142 = vst [vmem:[%s2124 + $0x40] sm:%s2116] %v2141
            %v2143 = vld [vmem:[%s2123 + $0x48] sm:%s2116]
            %2144 = vst [vmem:[%s2124 + $0x48] sm:%s2116] %v2143
            %v2145 = vld [vmem:[%s2123 + $0x50] sm:%s2116]
            %2146 = vst [vmem:[%s2124 + $0x50] sm:%s2116] %v2145
            %v2147 = vld [vmem:[%s2123 + $0x58] sm:%s2116]
            %2148 = vst [vmem:[%s2124 + $0x58] sm:%s2116] %v2147
            %v2149 = vld [vmem:[%s2123 + $0x60] sm:%s2116]
            %2150 = vst [vmem:[%s2124 + $0x60] sm:%s2116] %v2149
            %v2151 = vld [vmem:[%s2123 + $0x68] sm:%s2116]
            %2152 = vst [vmem:[%s2124 + $0x68] sm:%s2116] %v2151
            %v2153 = vld [vmem:[%s2123 + $0x70] sm:%s2116]
            %2154 = vst [vmem:[%s2124 + $0x70] sm:%s2116] %v2153
            %v2155 = vld [vmem:[%s2123 + $0x78] sm:%s2116]
            %2156 = vst [vmem:[%s2124 + $0x78] sm:%s2116] %v2155
            %v2157 = vld [vmem:[%s2123 + $0x80] sm:%s2116]
            %2158 = vst [vmem:[%s2124 + $0x80] sm:%s2116] %v2157
            %v2159 = vld [vmem:[%s2123 + $0x88] sm:%s2116]
            %2160 = vst [vmem:[%s2124 + $0x88] sm:%s2116] %v2159
            %v2161 = vld [vmem:[%s2123 + $0x90] sm:%s2116]
            %2162 = vst [vmem:[%s2124 + $0x90] sm:%s2116] %v2161
            %v2163 = vld [vmem:[%s2123 + $0x98] sm:%s2116]
            %2164 = vst [vmem:[%s2124 + $0x98] sm:%s2116] %v2163
            %v2165 = vld [vmem:[%s2123 + $0xa0] sm:%s2116]
            %2166 = vst [vmem:[%s2124 + $0xa0] sm:%s2116] %v2165
            %v2167 = vld [vmem:[%s2123 + $0xa8] sm:%s2116]
            %2168 = vst [vmem:[%s2124 + $0xa8] sm:%s2116] %v2167
            %v2169 = vld [vmem:[%s2123 + $0xb0] sm:%s2116]
            %2170 = vst [vmem:[%s2124 + $0xb0] sm:%s2116] %v2169
            %v2171 = vld [vmem:[%s2123 + $0xb8] sm:%s2116]
            %2172 = vst [vmem:[%s2124 + $0xb8] sm:%s2116] %v2171
            %v2173 = vld [vmem:[%s2123 + $0xc0] sm:%s2116]
            %2174 = vst [vmem:[%s2124 + $0xc0] sm:%s2116] %v2173
            %v2175 = vld [vmem:[%s2123 + $0xc8] sm:%s2116]
            %2176 = vst [vmem:[%s2124 + $0xc8] sm:%s2116] %v2175
            %v2177 = vld [vmem:[%s2123 + $0xd0] sm:%s2116]
            %2178 = vst [vmem:[%s2124 + $0xd0] sm:%s2116] %v2177
            %v2179 = vld [vmem:[%s2123 + $0xd8] sm:%s2116]
            %2180 = vst [vmem:[%s2124 + $0xd8] sm:%s2116] %v2179
            %v2181 = vld [vmem:[%s2123 + $0xe0] sm:%s2116]
            %2182 = vst [vmem:[%s2124 + $0xe0] sm:%s2116] %v2181
            %v2183 = vld [vmem:[%s2123 + $0xe8] sm:%s2116]
            %2184 = vst [vmem:[%s2124 + $0xe8] sm:%s2116] %v2183
            %v2185 = vld [vmem:[%s2123 + $0xf0] sm:%s2116]
            %2186 = vst [vmem:[%s2124 + $0xf0] sm:%s2116] %v2185
            %v2187 = vld [vmem:[%s2123 + $0xf8] sm:%s2116]
            %2188 = vst [vmem:[%s2124 + $0xf8] sm:%s2116] %v2187
            %v2189 = vld [vmem:[%s2123 + $0x100] sm:%s2116]
            %2190 = vst [vmem:[%s2124 + $0x100] sm:%s2116] %v2189
            %v2191 = vld [vmem:[%s2123 + $0x108] sm:%s2116]
            %2192 = vst [vmem:[%s2124 + $0x108] sm:%s2116] %v2191
            %v2193 = vld [vmem:[%s2123 + $0x110] sm:%s2116]
            %2194 = vst [vmem:[%s2124 + $0x110] sm:%s2116] %v2193
            %v2195 = vld [vmem:[%s2123 + $0x118] sm:%s2116]
            %2196 = vst [vmem:[%s2124 + $0x118] sm:%s2116] %v2195
            %v2197 = vld [vmem:[%s2123 + $0x120] sm:%s2116]
            %2198 = vst [vmem:[%s2124 + $0x120] sm:%s2116] %v2197
            %v2199 = vld [vmem:[%s2123 + $0x128] sm:%s2116]
            %2200 = vst [vmem:[%s2124 + $0x128] sm:%s2116] %v2199
            %v2201 = vld [vmem:[%s2123 + $0x130] sm:%s2116]
            %2202 = vst [vmem:[%s2124 + $0x130] sm:%s2116] %v2201
            %v2203 = vld [vmem:[%s2123 + $0x138] sm:%s2116]
            %2204 = vst [vmem:[%s2124 + $0x138] sm:%s2116] %v2203
            %v2205 = vld [vmem:[%s2123 + $0x140] sm:%s2116]
            %2206 = vst [vmem:[%s2124 + $0x140] sm:%s2116] %v2205
            %v2207 = vld [vmem:[%s2123 + $0x148] sm:%s2116]
            %2208 = vst [vmem:[%s2124 + $0x148] sm:%s2116] %v2207
            %v2209 = vld [vmem:[%s2123 + $0x150] sm:%s2116]
            %2210 = vst [vmem:[%s2124 + $0x150] sm:%s2116] %v2209
            %v2211 = vld [vmem:[%s2123 + $0x158] sm:%s2116]
            %2212 = vst [vmem:[%s2124 + $0x158] sm:%s2116] %v2211
            %v2213 = vld [vmem:[%s2123 + $0x160] sm:%s2116]
            %2214 = vst [vmem:[%s2124 + $0x160] sm:%s2116] %v2213
            %v2215 = vld [vmem:[%s2123 + $0x168] sm:%s2116]
            %2216 = vst [vmem:[%s2124 + $0x168] sm:%s2116] %v2215
            %v2217 = vld [vmem:[%s2123 + $0x170] sm:%s2116]
            %2218 = vst [vmem:[%s2124 + $0x170] sm:%s2116] %v2217
            %v2219 = vld [vmem:[%s2123 + $0x178] sm:%s2116]
            %2220 = vst [vmem:[%s2124 + $0x178] sm:%s2116] %v2219
            %v2221 = vld [vmem:[%s2123 + $0x180] sm:%s2116]
            %2222 = vst [vmem:[%s2124 + $0x180] sm:%s2116] %v2221
            %v2223 = vld [vmem:[%s2123 + $0x188] sm:%s2116]
            %2224 = vst [vmem:[%s2124 + $0x188] sm:%s2116] %v2223
            %v2225 = vld [vmem:[%s2123 + $0x190] sm:%s2116]
            %2226 = vst [vmem:[%s2124 + $0x190] sm:%s2116] %v2225
            %v2227 = vld [vmem:[%s2123 + $0x198] sm:%s2116]
            %2228 = vst [vmem:[%s2124 + $0x198] sm:%s2116] %v2227
            %v2229 = vld [vmem:[%s2123 + $0x1a0] sm:%s2116]
            %2230 = vst [vmem:[%s2124 + $0x1a0] sm:%s2116] %v2229
            %v2231 = vld [vmem:[%s2123 + $0x1a8] sm:%s2116]
            %2232 = vst [vmem:[%s2124 + $0x1a8] sm:%s2116] %v2231
            %v2233 = vld [vmem:[%s2123 + $0x1b0] sm:%s2116]
            %2234 = vst [vmem:[%s2124 + $0x1b0] sm:%s2116] %v2233
            %v2235 = vld [vmem:[%s2123 + $0x1b8] sm:%s2116]
            %2236 = vst [vmem:[%s2124 + $0x1b8] sm:%s2116] %v2235
            %v2237 = vld [vmem:[%s2123 + $0x1c0] sm:%s2116]
            %2238 = vst [vmem:[%s2124 + $0x1c0] sm:%s2116] %v2237
            %v2239 = vld [vmem:[%s2123 + $0x1c8] sm:%s2116]
            %2240 = vst [vmem:[%s2124 + $0x1c8] sm:%s2116] %v2239
            %v2241 = vld [vmem:[%s2123 + $0x1d0] sm:%s2116]
            %2242 = vst [vmem:[%s2124 + $0x1d0] sm:%s2116] %v2241
            %v2243 = vld [vmem:[%s2123 + $0x1d8] sm:%s2116]
            %2244 = vst [vmem:[%s2124 + $0x1d8] sm:%s2116] %v2243
            %v2245 = vld [vmem:[%s2123 + $0x1e0] sm:%s2116]
            %2246 = vst [vmem:[%s2124 + $0x1e0] sm:%s2116] %v2245
            %v2247 = vld [vmem:[%s2123 + $0x1e8] sm:%s2116]
            %2248 = vst [vmem:[%s2124 + $0x1e8] sm:%s2116] %v2247
            %v2249 = vld [vmem:[%s2123 + $0x1f0] sm:%s2116]
            %2250 = vst [vmem:[%s2124 + $0x1f0] sm:%s2116] %v2249
            %v2251 = vld [vmem:[%s2123 + $0x1f8] sm:%s2116]
            %2252 = vst [vmem:[%s2124 + $0x1f8] sm:%s2116] %v2251
            %v2253 = vld [vmem:[%s2123 + $0x200] sm:%s2116]
            %2254 = vst [vmem:[%s2124 + $0x200] sm:%s2116] %v2253
            %v2255 = vld [vmem:[%s2123 + $0x208] sm:%s2116]
            %2256 = vst [vmem:[%s2124 + $0x208] sm:%s2116] %v2255
            %v2257 = vld [vmem:[%s2123 + $0x210] sm:%s2116]
            %2258 = vst [vmem:[%s2124 + $0x210] sm:%s2116] %v2257
            %v2259 = vld [vmem:[%s2123 + $0x218] sm:%s2116]
            %2260 = vst [vmem:[%s2124 + $0x218] sm:%s2116] %v2259
            %v2261 = vld [vmem:[%s2123 + $0x220] sm:%s2116]
            %2262 = vst [vmem:[%s2124 + $0x220] sm:%s2116] %v2261
            %v2263 = vld [vmem:[%s2123 + $0x228] sm:%s2116]
            %2264 = vst [vmem:[%s2124 + $0x228] sm:%s2116] %v2263
            %v2265 = vld [vmem:[%s2123 + $0x230] sm:%s2116]
            %2266 = vst [vmem:[%s2124 + $0x230] sm:%s2116] %v2265
            %v2267 = vld [vmem:[%s2123 + $0x238] sm:%s2116]
            %2268 = vst [vmem:[%s2124 + $0x238] sm:%s2116] %v2267
            %v2269 = vld [vmem:[%s2123 + $0x240] sm:%s2116]
            %2270 = vst [vmem:[%s2124 + $0x240] sm:%s2116] %v2269
            %v2271 = vld [vmem:[%s2123 + $0x248] sm:%s2116]
            %2272 = vst [vmem:[%s2124 + $0x248] sm:%s2116] %v2271
            %v2273 = vld [vmem:[%s2123 + $0x250] sm:%s2116]
            %2274 = vst [vmem:[%s2124 + $0x250] sm:%s2116] %v2273
            %v2275 = vld [vmem:[%s2123 + $0x258] sm:%s2116]
            %2276 = vst [vmem:[%s2124 + $0x258] sm:%s2116] %v2275
            %v2277 = vld [vmem:[%s2123 + $0x260] sm:%s2116]
            %2278 = vst [vmem:[%s2124 + $0x260] sm:%s2116] %v2277
            %v2279 = vld [vmem:[%s2123 + $0x268] sm:%s2116]
            %2280 = vst [vmem:[%s2124 + $0x268] sm:%s2116] %v2279
            %v2281 = vld [vmem:[%s2123 + $0x270] sm:%s2116]
            %2282 = vst [vmem:[%s2124 + $0x270] sm:%s2116] %v2281
            %v2283 = vld [vmem:[%s2123 + $0x278] sm:%s2116]
            %2284 = vst [vmem:[%s2124 + $0x278] sm:%s2116] %v2283
            %v2285 = vld [vmem:[%s2123 + $0x280] sm:%s2116]
            %2286 = vst [vmem:[%s2124 + $0x280] sm:%s2116] %v2285
            %v2287 = vld [vmem:[%s2123 + $0x288] sm:%s2116]
            %2288 = vst [vmem:[%s2124 + $0x288] sm:%s2116] %v2287
            %v2289 = vld [vmem:[%s2123 + $0x290] sm:%s2116]
            %2290 = vst [vmem:[%s2124 + $0x290] sm:%s2116] %v2289
            %v2291 = vld [vmem:[%s2123 + $0x298] sm:%s2116]
            %2292 = vst [vmem:[%s2124 + $0x298] sm:%s2116] %v2291
            %v2293 = vld [vmem:[%s2123 + $0x2a0] sm:%s2116]
            %2294 = vst [vmem:[%s2124 + $0x2a0] sm:%s2116] %v2293
            %v2295 = vld [vmem:[%s2123 + $0x2a8] sm:%s2116]
            %2296 = vst [vmem:[%s2124 + $0x2a8] sm:%s2116] %v2295
            %v2297 = vld [vmem:[%s2123 + $0x2b0] sm:%s2116]
            %2298 = vst [vmem:[%s2124 + $0x2b0] sm:%s2116] %v2297
            %v2299 = vld [vmem:[%s2123 + $0x2b8] sm:%s2116]
            %2300 = vst [vmem:[%s2124 + $0x2b8] sm:%s2116] %v2299
            %v2301 = vld [vmem:[%s2123 + $0x2c0] sm:%s2116]
            %2302 = vst [vmem:[%s2124 + $0x2c0] sm:%s2116] %v2301
            %v2303 = vld [vmem:[%s2123 + $0x2c8] sm:%s2116]
            %2304 = vst [vmem:[%s2124 + $0x2c8] sm:%s2116] %v2303
            %v2305 = vld [vmem:[%s2123 + $0x2d0] sm:%s2116]
            %2306 = vst [vmem:[%s2124 + $0x2d0] sm:%s2116] %v2305
            %v2307 = vld [vmem:[%s2123 + $0x2d8] sm:%s2116]
            %2308 = vst [vmem:[%s2124 + $0x2d8] sm:%s2116] %v2307
            %v2309 = vld [vmem:[%s2123 + $0x2e0] sm:%s2116]
            %2310 = vst [vmem:[%s2124 + $0x2e0] sm:%s2116] %v2309
            %v2311 = vld [vmem:[%s2123 + $0x2e8] sm:%s2116]
            %2312 = vst [vmem:[%s2124 + $0x2e8] sm:%s2116] %v2311
            %v2313 = vld [vmem:[%s2123 + $0x2f0] sm:%s2116]
            %2314 = vst [vmem:[%s2124 + $0x2f0] sm:%s2116] %v2313
            %v2315 = vld [vmem:[%s2123 + $0x2f8] sm:%s2116]
            %2316 = vst [vmem:[%s2124 + $0x2f8] sm:%s2116] %v2315
            %v2317 = vld [vmem:[%s2123 + $0x300] sm:%s2116]
            %2318 = vst [vmem:[%s2124 + $0x300] sm:%s2116] %v2317
            %v2319 = vld [vmem:[%s2123 + $0x308] sm:%s2116]
            %2320 = vst [vmem:[%s2124 + $0x308] sm:%s2116] %v2319
            %v2321 = vld [vmem:[%s2123 + $0x310] sm:%s2116]
            %2322 = vst [vmem:[%s2124 + $0x310] sm:%s2116] %v2321
            %v2323 = vld [vmem:[%s2123 + $0x318] sm:%s2116]
            %2324 = vst [vmem:[%s2124 + $0x318] sm:%s2116] %v2323
            %v2325 = vld [vmem:[%s2123 + $0x320] sm:%s2116]
            %2326 = vst [vmem:[%s2124 + $0x320] sm:%s2116] %v2325
            %v2327 = vld [vmem:[%s2123 + $0x328] sm:%s2116]
            %2328 = vst [vmem:[%s2124 + $0x328] sm:%s2116] %v2327
            %v2329 = vld [vmem:[%s2123 + $0x330] sm:%s2116]
            %2330 = vst [vmem:[%s2124 + $0x330] sm:%s2116] %v2329
            %v2331 = vld [vmem:[%s2123 + $0x338] sm:%s2116]
            %2332 = vst [vmem:[%s2124 + $0x338] sm:%s2116] %v2331
            %v2333 = vld [vmem:[%s2123 + $0x340] sm:%s2116]
            %2334 = vst [vmem:[%s2124 + $0x340] sm:%s2116] %v2333
            %v2335 = vld [vmem:[%s2123 + $0x348] sm:%s2116]
            %2336 = vst [vmem:[%s2124 + $0x348] sm:%s2116] %v2335
            %v2337 = vld [vmem:[%s2123 + $0x350] sm:%s2116]
            %2338 = vst [vmem:[%s2124 + $0x350] sm:%s2116] %v2337
            %v2339 = vld [vmem:[%s2123 + $0x358] sm:%s2116]
            %2340 = vst [vmem:[%s2124 + $0x358] sm:%s2116] %v2339
            %v2341 = vld [vmem:[%s2123 + $0x360] sm:%s2116]
            %2342 = vst [vmem:[%s2124 + $0x360] sm:%s2116] %v2341
            %v2343 = vld [vmem:[%s2123 + $0x368] sm:%s2116]
            %2344 = vst [vmem:[%s2124 + $0x368] sm:%s2116] %v2343
            %v2345 = vld [vmem:[%s2123 + $0x370] sm:%s2116]
            %2346 = vst [vmem:[%s2124 + $0x370] sm:%s2116] %v2345
            %v2347 = vld [vmem:[%s2123 + $0x378] sm:%s2116]
            %2348 = vst [vmem:[%s2124 + $0x378] sm:%s2116] %v2347
            %v2349 = vld [vmem:[%s2123 + $0x380] sm:%s2116]
            %2350 = vst [vmem:[%s2124 + $0x380] sm:%s2116] %v2349
            %v2351 = vld [vmem:[%s2123 + $0x388] sm:%s2116]
            %2352 = vst [vmem:[%s2124 + $0x388] sm:%s2116] %v2351
            %v2353 = vld [vmem:[%s2123 + $0x390] sm:%s2116]
            %2354 = vst [vmem:[%s2124 + $0x390] sm:%s2116] %v2353
            %v2355 = vld [vmem:[%s2123 + $0x398] sm:%s2116]
            %2356 = vst [vmem:[%s2124 + $0x398] sm:%s2116] %v2355
            %v2357 = vld [vmem:[%s2123 + $0x3a0] sm:%s2116]
            %2358 = vst [vmem:[%s2124 + $0x3a0] sm:%s2116] %v2357
            %v2359 = vld [vmem:[%s2123 + $0x3a8] sm:%s2116]
            %2360 = vst [vmem:[%s2124 + $0x3a8] sm:%s2116] %v2359
            %v2361 = vld [vmem:[%s2123 + $0x3b0] sm:%s2116]
            %2362 = vst [vmem:[%s2124 + $0x3b0] sm:%s2116] %v2361
            %v2363 = vld [vmem:[%s2123 + $0x3b8] sm:%s2116]
            %2364 = vst [vmem:[%s2124 + $0x3b8] sm:%s2116] %v2363
            %v2365 = vld [vmem:[%s2123 + $0x3c0] sm:%s2116]
            %2366 = vst [vmem:[%s2124 + $0x3c0] sm:%s2116] %v2365
            %v2367 = vld [vmem:[%s2123 + $0x3c8] sm:%s2116]
            %2368 = vst [vmem:[%s2124 + $0x3c8] sm:%s2116] %v2367
            %v2369 = vld [vmem:[%s2123 + $0x3d0] sm:%s2116]
            %2370 = vst [vmem:[%s2124 + $0x3d0] sm:%s2116] %v2369
            %v2371 = vld [vmem:[%s2123 + $0x3d8] sm:%s2116]
            %2372 = vst [vmem:[%s2124 + $0x3d8] sm:%s2116] %v2371
            %v2373 = vld [vmem:[%s2123 + $0x3e0] sm:%s2116]
            %2374 = vst [vmem:[%s2124 + $0x3e0] sm:%s2116] %v2373
          $region33: #{tpu_custom_call.1} parent=27 // loop_footer
            %s2122 = sadd.s32 1, %s2118
          $region34: #{tpu_custom_call.1} parent=27 // loop_footer_branch
            %2117 = sbr.rel target = $region30
          $region35: #{tpu_custom_call.1} parent=27 // loop_exit
            _
        $region28: #{tpu_custom_call.1} parent=19 // pred_fallthru
          _
      $region20: #{tpu_custom_call.1} parent=15 // pred_fallthru
        _
      %2637 = vnop
    $region16: #{tpu_custom_call.1} parent=1 // pred_fallthru
      _
    // Predicated region
    $region51: #{tpu_custom_call.1} parent=1 // pred_check
      _
    $region52: #{tpu_custom_call.1} parent=1 // pred_check_branch
      %2639 = sbr.rel (0) target = $region54
    $region53: #{tpu_custom_call.1} parent=1 // pred_region
      _
    $region54: #{tpu_custom_call.1} parent=1 // pred_fallthru
      _

</llo_original>
